<compile_context>
chip_gen: v7x
topology: tpu7x:2x2x1
jax: 0.10.0
libtpu: 0.0.40
codegen_flags: <defaults>
</compile_context>

<pallas_src>
import math
import functools

import jax
import jax.numpy as jnp
from jax.experimental import pallas as pl
from jax.experimental.pallas import tpu as pltpu


# ----------------------------------------------------------------------------
# Fused kernel: whole encoder block for ONE batch per grid step
# ----------------------------------------------------------------------------
def encoder_block_kernel(x_ref, win_ref, bin_ref, wout_ref, bout_ref,
                         ln1g_ref, ln1b_ref,
                         w1_ref, b1_ref, w2_ref, b2_ref,
                         ln2g_ref, ln2b_ref,
                         o_ref, *, num_heads):
    E = x_ref.shape[-1]
    H = num_heads
    D = E // H

    x = x_ref[...].astype(jnp.float32)                     # (S, E), one batch

    # ---- QKV projection: one fused MXU matmul -----------------------------
    # (1/sqrt(D) is pre-folded into the Q columns of win/bin)
    qkv = jnp.dot(x, win_ref[...], preferred_element_type=jnp.float32) + bin_ref[...]
    q = qkv[:, :E]
    k = qkv[:, E:2 * E]
    v = qkv[:, 2 * E:]

    wout = wout_ref[...]                                    # (E, E), pre-transposed

    # ---- per-head attention with the out-projection fused in --------------
    #   attn_concat @ Wout == sum_h (p_h @ v_h) @ Wout[h*D:(h+1)*D, :]
    # Accumulate in vregs; no scratch buffer, no masked stores.
    attn_out = jnp.zeros_like(x)                            # (S, E) f32
    for h in range(H):
        c0 = h * D
        qh = q[:, c0:c0 + D]                                 # (S, D)
        kh = k[:, c0:c0 + D]
        vh = v[:, c0:c0 + D]
        s = jnp.einsum('qd,kd->qk', qh, kh,
                       preferred_element_type=jnp.float32)   # (S, S)
        m = jnp.max(s, axis=-1, keepdims=True)
        p = jnp.exp(s - m)
        l = jnp.sum(p, axis=-1, keepdims=True)
        p = p * pl.reciprocal(l, approx=True)                # EUP, off VALU path
        # per-head out-proj slab first (softmax-independent, wide MXU push)
        vo = jnp.dot(vh, wout[c0:c0 + D, :],
                     preferred_element_type=jnp.float32)     # (S, E)
        attn_out = attn_out + jnp.dot(p, vo,
                                      preferred_element_type=jnp.float32)
    attn_out = attn_out + bout_ref[...]
    # dropout(p=0.1) is identity in eval/inference mode

    # ---- residual + LayerNorm 1 (single-pass stats) ------------------------
    z1 = x + attn_out
    mu1 = jnp.mean(z1, axis=-1, keepdims=True)
    var1 = jnp.mean(z1 * z1, axis=-1, keepdims=True) - mu1 * mu1
    y1 = (z1 - mu1) * jax.lax.rsqrt(var1 + 1e-5) * ln1g_ref[...] + ln1b_ref[...]

    # ---- FFN: Linear(E,4E) -> ReLU -> Linear(4E,E) --------------------------
    # TODO(synk): for large E (>~512), tile the 4E dimension with a grid axis
    # and a pl.when-guarded accumulator instead of keeping both FFN weights
    # fully VMEM-resident (v7x has only 64 MiB physical VMEM).
    hdn = jnp.dot(y1, w1_ref[...], preferred_element_type=jnp.float32) + b1_ref[...]
    hdn = jnp.maximum(hdn, 0.0)
    f = jnp.dot(hdn, w2_ref[...], preferred_element_type=jnp.float32) + b2_ref[...]

    # ---- residual + LayerNorm 2 ---------------------------------------------
    z2 = y1 + f
    mu2 = jnp.mean(z2, axis=-1, keepdims=True)
    var2 = jnp.mean(z2 * z2, axis=-1, keepdims=True) - mu2 * mu2
    y2 = (z2 - mu2) * jax.lax.rsqrt(var2 + 1e-5) * ln2g_ref[...] + ln2b_ref[...]

    o_ref[...] = y2.astype(o_ref.dtype)


# ----------------------------------------------------------------------------
# One-time parameter preprocessing (hoisted out of the per-call path)
# ----------------------------------------------------------------------------
def prepare_params(params, num_heads):
    E = params["ln1_g"].shape[0]
    D = E // num_heads
    scale = 1.0 / math.sqrt(D)

    # Fold 1/sqrt(D) into the Q slab of the (pre-transposed) in_proj weight/bias.
    win = params["in_proj_w"].T                              # (E, 3E)
    bin_ = params["in_proj_b"]                                # (3E,)
    qsc = jnp.concatenate([jnp.full((E,), scale, jnp.float32),
                           jnp.ones((2 * E,), jnp.float32)])
    win = win * qsc[None, :]
    bin_ = bin_ * qsc

    def row(v):
        return v.reshape(1, -1)

    return (
        win, row(bin_),                                       # (E,3E), (1,3E)
        params["out_proj_w"].T, row(params["out_proj_b"]),    # (E,E),  (1,E)
        row(params["ln1_g"]), row(params["ln1_b"]),
        params["ffn_w1"].T, row(params["ffn_b1"]),            # (E,4E), (1,4E)
        params["ffn_w2"].T, row(params["ffn_b2"]),            # (4E,E), (1,E)
        row(params["ln2_g"]), row(params["ln2_b"]),
    )


# ----------------------------------------------------------------------------
# Wrapper: single pallas_call, grid over batch (parallel across TCs on v7x)
# ----------------------------------------------------------------------------
def transformer_encoder_block(x, prepped, num_heads):
    # x: (S, N, E) -- sequence-first, like torch nn.MultiheadAttention default
    S, N, E = x.shape
    assert E % num_heads == 0

    # batch-major 2-D layout: rows [n*S : (n+1)*S] belong to batch n
    x2d = jnp.transpose(x, (1, 0, 2)).reshape(N * S, E)

    def replicated(a):
        nd = a.ndim
        return pl.BlockSpec(a.shape, lambda n, _nd=nd: (0,) * _nd)

    in_specs = [pl.BlockSpec((S, E), lambda n: (n, 0))] + [replicated(a) for a in prepped]
    out_specs = pl.BlockSpec((S, E), lambda n: (n, 0))

    out2d = pl.pallas_call(
        functools.partial(encoder_block_kernel, num_heads=num_heads),
        out_shape=jax.ShapeDtypeStruct((N * S, E), x.dtype),
        grid=(N,),
        in_specs=in_specs,
        out_specs=out_specs,
        compiler_params=pltpu.CompilerParams(
            dimension_semantics=("parallel",),
            vmem_limit_bytes=32 * 1024 * 1024),
    )(x2d, *prepped)

    return out2d.reshape(N, S, E).transpose(1, 0, 2)          # back to (S, N, E)


# ----------------------------------------------------------------------------
# Pure-JAX reference (for correctness check)
# ----------------------------------------------------------------------------
def reference_block(x, params, num_heads):
    hp = jax.lax.Precision.HIGHEST
    S, N, E = x.shape
    H = num_heads
    D = E // H
    scale = 1.0 / math.sqrt(D)

    x2 = x.reshape(S * N, E)
    qkv = jnp.dot(x2, params["in_proj_w"].T, precision=hp) + params["in_proj_b"]
    q, k, v = jnp.split(qkv, 3, axis=-1)

    def heads(t):
        return t.reshape(S, N * H, D).transpose(1, 0, 2)       # (N*H, S, D)

    qh, kh, vh = heads(q) * scale, heads(k), heads(v)
    s = jnp.einsum('bsd,btd->bst', qh, kh, precision=hp)
    p = jax.nn.softmax(s, axis=-1)
    a = jnp.einsum('bst,btd->bsd', p, vh, precision=hp)
    a2 = a.transpose(1, 0, 2).reshape(S * N, E)
    attn_out = jnp.dot(a2, params["out_proj_w"].T, precision=hp) + params["out_proj_b"]

    def ln(z, g, b):
        mu = z.mean(-1, keepdims=True)
        var = ((z - mu) ** 2).mean(-1, keepdims=True)
        return (z - mu) / jnp.sqrt(var + 1e-5) * g + b

    y1 = ln(x2 + attn_out, params["ln1_g"], params["ln1_b"])
    h = jnp.maximum(jnp.dot(y1, params["ffn_w1"].T, precision=hp) + params["ffn_b1"], 0.0)
    f = jnp.dot(h, params["ffn_w2"].T, precision=hp) + params["ffn_b2"]
    y2 = ln(y1 + f, params["ln2_g"], params["ln2_b"])
    return y2.reshape(S, N, E)


# ----------------------------------------------------------------------------
# Deterministic parameter construction + run
# ----------------------------------------------------------------------------
def make_params(key, model_dim):
    E = model_dim
    ks = jax.random.split(key, 8)
    s = 0.02
    return {
        # torch-layout weights: (out_features, in_features)
        "in_proj_w": jax.random.normal(ks[0], (3 * E, E), jnp.float32) * s,
        "in_proj_b": jax.random.normal(ks[1], (3 * E,), jnp.float32) * s,
        "out_proj_w": jax.random.normal(ks[2], (E, E), jnp.float32) * s,
        "out_proj_b": jax.random.normal(ks[3], (E,), jnp.float32) * s,
        "ffn_w1": jax.random.normal(ks[4], (4 * E, E), jnp.float32) * s,
        "ffn_b1": jax.random.normal(ks[5], (4 * E,), jnp.float32) * s,
        "ffn_w2": jax.random.normal(ks[6], (E, 4 * E), jnp.float32) * s,
        "ffn_b2": jax.random.normal(ks[7], (E,), jnp.float32) * s,
        "ln1_g": jnp.ones((E,), jnp.float32),
        "ln1_b": jnp.zeros((E,), jnp.float32),
        "ln2_g": jnp.ones((E,), jnp.float32),
        "ln2_b": jnp.zeros((E,), jnp.float32),
    }


if __name__ == "__main__":
    S, N, E, H = 8, 2, 32, 4   # seq=8, batch=2, model_dim=32, num_heads=4

    root = jax.random.PRNGKey(0)
    k_x, k_p = jax.random.split(root)
    x = jax.random.normal(k_x, (S, N, E), jnp.float32)
    params = make_params(k_p, E)

    prepped = prepare_params(params, H)   # one-time weight transform, not per call

    out = transformer_encoder_block(x, prepped, num_heads=H)
    out = jax.block_until_ready(out)

    assert out.shape == (S, N, E)
    assert bool(jnp.all(jnp.isfinite(out)))

    ref = reference_block(x, params, num_heads=H)
    assert bool(jnp.allclose(out, ref, atol=1e-3, rtol=1e-3)), (
        float(jnp.max(jnp.abs(out - ref))))

    print("KERNEL_OK")
</pallas_src>

<mosaic_0001>
module attributes {stable_mosaic.version = 11 : i64} {
  func.func @encoder_block_kernel(%arg0: i32, %arg1: memref<8x32xf32, #tpu.memory_space<vmem>>, %arg2: memref<32x96xf32, #tpu.memory_space<vmem>>, %arg3: memref<1x96xf32, #tpu.memory_space<vmem>>, %arg4: memref<32x32xf32, #tpu.memory_space<vmem>>, %arg5: memref<1x32xf32, #tpu.memory_space<vmem>>, %arg6: memref<1x32xf32, #tpu.memory_space<vmem>>, %arg7: memref<1x32xf32, #tpu.memory_space<vmem>>, %arg8: memref<32x128xf32, #tpu.memory_space<vmem>>, %arg9: memref<1x128xf32, #tpu.memory_space<vmem>>, %arg10: memref<128x32xf32, #tpu.memory_space<vmem>>, %arg11: memref<1x32xf32, #tpu.memory_space<vmem>>, %arg12: memref<1x32xf32, #tpu.memory_space<vmem>>, %arg13: memref<1x32xf32, #tpu.memory_space<vmem>>, %arg14: memref<8x32xf32, #tpu.memory_space<vmem>>) attributes {dimension_semantics = [#tpu.dimension_semantics<parallel>], iteration_bounds = array<i64: 2>, scalar_prefetch = 0 : i64, scratch_operands = 0 : i64, tpu.core_type = #tpu.core_type<tc>, window_params = [{transform_indices = @transform_0, window_bounds = array<i64: 8, 32>}, {pipeline_mode = #tpu.pipeline_mode<synchronous>, transform_indices = @transform_1, window_bounds = array<i64: 32, 96>}, {pipeline_mode = #tpu.pipeline_mode<synchronous>, transform_indices = @transform_2, window_bounds = array<i64: 1, 96>}, {pipeline_mode = #tpu.pipeline_mode<synchronous>, transform_indices = @transform_3, window_bounds = array<i64: 32, 32>}, {pipeline_mode = #tpu.pipeline_mode<synchronous>, transform_indices = @transform_4, window_bounds = array<i64: 1, 32>}, {pipeline_mode = #tpu.pipeline_mode<synchronous>, transform_indices = @transform_5, window_bounds = array<i64: 1, 32>}, {pipeline_mode = #tpu.pipeline_mode<synchronous>, transform_indices = @transform_6, window_bounds = array<i64: 1, 32>}, {pipeline_mode = #tpu.pipeline_mode<synchronous>, transform_indices = @transform_7, window_bounds = array<i64: 32, 128>}, {pipeline_mode = #tpu.pipeline_mode<synchronous>, transform_indices = @transform_8, window_bounds = array<i64: 1, 128>}, {pipeline_mode = #tpu.pipeline_mode<synchronous>, transform_indices = @transform_9, window_bounds = array<i64: 128, 32>}, {pipeline_mode = #tpu.pipeline_mode<synchronous>, transform_indices = @transform_10, window_bounds = array<i64: 1, 32>}, {pipeline_mode = #tpu.pipeline_mode<synchronous>, transform_indices = @transform_11, window_bounds = array<i64: 1, 32>}, {pipeline_mode = #tpu.pipeline_mode<synchronous>, transform_indices = @transform_12, window_bounds = array<i64: 1, 32>}, {transform_indices = @transform_13, window_bounds = array<i64: 8, 32>}]} {
    %c0 = arith.constant 0 : index
    %c0_0 = arith.constant 0 : index
    %0 = vector.load %arg1[%c0, %c0_0] : memref<8x32xf32, #tpu.memory_space<vmem>>, vector<8x32xf32>
    %c0_1 = arith.constant 0 : index
    %c0_2 = arith.constant 0 : index
    %1 = vector.load %arg2[%c0_1, %c0_2] : memref<32x96xf32, #tpu.memory_space<vmem>>, vector<32x96xf32>
    %cst = arith.constant dense<0.000000e+00> : vector<8x96xf32>
    %2 = tpu.matmul %0, %1, %cst {dimension_numbers = #tpu.dot_dimension_numbers<[1], [0], [0], [1], [0, 0, 1, 1], [], []>} : vector<8x32xf32>, vector<32x96xf32>, vector<8x96xf32> -> vector<8x96xf32>
    %c0_3 = arith.constant 0 : index
    %c0_4 = arith.constant 0 : index
    %3 = vector.load %arg3[%c0_3, %c0_4] : memref<1x96xf32, #tpu.memory_space<vmem>>, vector<1x96xf32>
    %4 = vector.broadcast %3 : vector<1x96xf32> to vector<8x96xf32>
    %5 = arith.addf %2, %4 : vector<8x96xf32>
    %6 = vector.extract_strided_slice %5 {offsets = [0, 0], sizes = [8, 32], strides = [1, 1]} : vector<8x96xf32> to vector<8x32xf32>
    %7 = vector.extract_strided_slice %5 {offsets = [0, 32], sizes = [8, 32], strides = [1, 1]} : vector<8x96xf32> to vector<8x32xf32>
    %8 = vector.extract_strided_slice %5 {offsets = [0, 64], sizes = [8, 32], strides = [1, 1]} : vector<8x96xf32> to vector<8x32xf32>
    %c0_5 = arith.constant 0 : index
    %c0_6 = arith.constant 0 : index
    %9 = vector.load %arg4[%c0_5, %c0_6] : memref<32x32xf32, #tpu.memory_space<vmem>>, vector<32x32xf32>
    %cst_7 = arith.constant 0.000000e+00 : f32
    %10 = vector.broadcast %cst_7 : f32 to vector<8x32xf32>
    %11 = vector.extract_strided_slice %6 {offsets = [0, 0], sizes = [8, 8], strides = [1, 1]} : vector<8x32xf32> to vector<8x8xf32>
    %12 = vector.extract_strided_slice %7 {offsets = [0, 0], sizes = [8, 8], strides = [1, 1]} : vector<8x32xf32> to vector<8x8xf32>
    %13 = vector.extract_strided_slice %8 {offsets = [0, 0], sizes = [8, 8], strides = [1, 1]} : vector<8x32xf32> to vector<8x8xf32>
    "tpu.trace_start"() <{level = 10 : i32, message = "qd,kd->qk"}> : () -> ()
    %cst_8 = arith.constant dense<0.000000e+00> : vector<8x8xf32>
    %14 = tpu.matmul %11, %12, %cst_8 {dimension_numbers = #tpu.dot_dimension_numbers<[1], [1], [0], [0], [0, 0, 1, 0], [], []>} : vector<8x8xf32>, vector<8x8xf32>, vector<8x8xf32> -> vector<8x8xf32>
    "tpu.trace_stop"() : () -> ()
    %cst_9 = arith.constant dense<0xFF800000> : vector<8xf32>
    %15 = vector.multi_reduction <maximumf>, %14, %cst_9 [1] : vector<8x8xf32> to vector<8xf32>
    %16 = vector.shape_cast %15 : vector<8xf32> to vector<8x1xf32>
    %17 = vector.broadcast %16 : vector<8x1xf32> to vector<8x8xf32>
    %18 = arith.subf %14, %17 : vector<8x8xf32>
    %19 = math.exp %18 : vector<8x8xf32>
    %cst_10 = arith.constant dense<0.000000e+00> : vector<8xf32>
    %20 = vector.multi_reduction <add>, %19, %cst_10 [1] : vector<8x8xf32> to vector<8xf32>
    %21 = vector.shape_cast %20 : vector<8xf32> to vector<8x1xf32>
    %22 = tpu.reciprocal %21 {approx = true} : vector<8x1xf32> -> vector<8x1xf32>
    %23 = vector.broadcast %22 : vector<8x1xf32> to vector<8x8xf32>
    %24 = arith.mulf %19, %23 : vector<8x8xf32>
    %25 = vector.extract_strided_slice %9 {offsets = [0, 0], sizes = [8, 32], strides = [1, 1]} : vector<32x32xf32> to vector<8x32xf32>
    %cst_11 = arith.constant dense<0.000000e+00> : vector<8x32xf32>
    %26 = tpu.matmul %13, %25, %cst_11 {dimension_numbers = #tpu.dot_dimension_numbers<[1], [0], [0], [1], [0, 0, 1, 1], [], []>} : vector<8x8xf32>, vector<8x32xf32>, vector<8x32xf32> -> vector<8x32xf32>
    %cst_12 = arith.constant dense<0.000000e+00> : vector<8x32xf32>
    %27 = tpu.matmul %24, %26, %cst_12 {dimension_numbers = #tpu.dot_dimension_numbers<[1], [0], [0], [1], [0, 0, 1, 1], [], []>} : vector<8x8xf32>, vector<8x32xf32>, vector<8x32xf32> -> vector<8x32xf32>
    %28 = arith.addf %10, %27 : vector<8x32xf32>
    %29 = vector.extract_strided_slice %6 {offsets = [0, 8], sizes = [8, 8], strides = [1, 1]} : vector<8x32xf32> to vector<8x8xf32>
    %30 = vector.extract_strided_slice %7 {offsets = [0, 8], sizes = [8, 8], strides = [1, 1]} : vector<8x32xf32> to vector<8x8xf32>
    %31 = vector.extract_strided_slice %8 {offsets = [0, 8], sizes = [8, 8], strides = [1, 1]} : vector<8x32xf32> to vector<8x8xf32>
    "tpu.trace_start"() <{level = 10 : i32, message = "qd,kd->qk"}> : () -> ()
    %cst_13 = arith.constant dense<0.000000e+00> : vector<8x8xf32>
    %32 = tpu.matmul %29, %30, %cst_13 {dimension_numbers = #tpu.dot_dimension_numbers<[1], [1], [0], [0], [0, 0, 1, 0], [], []>} : vector<8x8xf32>, vector<8x8xf32>, vector<8x8xf32> -> vector<8x8xf32>
    "tpu.trace_stop"() : () -> ()
    %cst_14 = arith.constant dense<0xFF800000> : vector<8xf32>
    %33 = vector.multi_reduction <maximumf>, %32, %cst_14 [1] : vector<8x8xf32> to vector<8xf32>
    %34 = vector.shape_cast %33 : vector<8xf32> to vector<8x1xf32>
    %35 = vector.broadcast %34 : vector<8x1xf32> to vector<8x8xf32>
    %36 = arith.subf %32, %35 : vector<8x8xf32>
    %37 = math.exp %36 : vector<8x8xf32>
    %cst_15 = arith.constant dense<0.000000e+00> : vector<8xf32>
    %38 = vector.multi_reduction <add>, %37, %cst_15 [1] : vector<8x8xf32> to vector<8xf32>
    %39 = vector.shape_cast %38 : vector<8xf32> to vector<8x1xf32>
    %40 = tpu.reciprocal %39 {approx = true} : vector<8x1xf32> -> vector<8x1xf32>
    %41 = vector.broadcast %40 : vector<8x1xf32> to vector<8x8xf32>
    %42 = arith.mulf %37, %41 : vector<8x8xf32>
    %43 = vector.extract_strided_slice %9 {offsets = [8, 0], sizes = [8, 32], strides = [1, 1]} : vector<32x32xf32> to vector<8x32xf32>
    %cst_16 = arith.constant dense<0.000000e+00> : vector<8x32xf32>
    %44 = tpu.matmul %31, %43, %cst_16 {dimension_numbers = #tpu.dot_dimension_numbers<[1], [0], [0], [1], [0, 0, 1, 1], [], []>} : vector<8x8xf32>, vector<8x32xf32>, vector<8x32xf32> -> vector<8x32xf32>
    %cst_17 = arith.constant dense<0.000000e+00> : vector<8x32xf32>
    %45 = tpu.matmul %42, %44, %cst_17 {dimension_numbers = #tpu.dot_dimension_numbers<[1], [0], [0], [1], [0, 0, 1, 1], [], []>} : vector<8x8xf32>, vector<8x32xf32>, vector<8x32xf32> -> vector<8x32xf32>
    %46 = arith.addf %28, %45 : vector<8x32xf32>
    %47 = vector.extract_strided_slice %6 {offsets = [0, 16], sizes = [8, 8], strides = [1, 1]} : vector<8x32xf32> to vector<8x8xf32>
    %48 = vector.extract_strided_slice %7 {offsets = [0, 16], sizes = [8, 8], strides = [1, 1]} : vector<8x32xf32> to vector<8x8xf32>
    %49 = vector.extract_strided_slice %8 {offsets = [0, 16], sizes = [8, 8], strides = [1, 1]} : vector<8x32xf32> to vector<8x8xf32>
    "tpu.trace_start"() <{level = 10 : i32, message = "qd,kd->qk"}> : () -> ()
    %cst_18 = arith.constant dense<0.000000e+00> : vector<8x8xf32>
    %50 = tpu.matmul %47, %48, %cst_18 {dimension_numbers = #tpu.dot_dimension_numbers<[1], [1], [0], [0], [0, 0, 1, 0], [], []>} : vector<8x8xf32>, vector<8x8xf32>, vector<8x8xf32> -> vector<8x8xf32>
    "tpu.trace_stop"() : () -> ()
    %cst_19 = arith.constant dense<0xFF800000> : vector<8xf32>
    %51 = vector.multi_reduction <maximumf>, %50, %cst_19 [1] : vector<8x8xf32> to vector<8xf32>
    %52 = vector.shape_cast %51 : vector<8xf32> to vector<8x1xf32>
    %53 = vector.broadcast %52 : vector<8x1xf32> to vector<8x8xf32>
    %54 = arith.subf %50, %53 : vector<8x8xf32>
    %55 = math.exp %54 : vector<8x8xf32>
    %cst_20 = arith.constant dense<0.000000e+00> : vector<8xf32>
    %56 = vector.multi_reduction <add>, %55, %cst_20 [1] : vector<8x8xf32> to vector<8xf32>
    %57 = vector.shape_cast %56 : vector<8xf32> to vector<8x1xf32>
    %58 = tpu.reciprocal %57 {approx = true} : vector<8x1xf32> -> vector<8x1xf32>
    %59 = vector.broadcast %58 : vector<8x1xf32> to vector<8x8xf32>
    %60 = arith.mulf %55, %59 : vector<8x8xf32>
    %61 = vector.extract_strided_slice %9 {offsets = [16, 0], sizes = [8, 32], strides = [1, 1]} : vector<32x32xf32> to vector<8x32xf32>
    %cst_21 = arith.constant dense<0.000000e+00> : vector<8x32xf32>
    %62 = tpu.matmul %49, %61, %cst_21 {dimension_numbers = #tpu.dot_dimension_numbers<[1], [0], [0], [1], [0, 0, 1, 1], [], []>} : vector<8x8xf32>, vector<8x32xf32>, vector<8x32xf32> -> vector<8x32xf32>
    %cst_22 = arith.constant dense<0.000000e+00> : vector<8x32xf32>
    %63 = tpu.matmul %60, %62, %cst_22 {dimension_numbers = #tpu.dot_dimension_numbers<[1], [0], [0], [1], [0, 0, 1, 1], [], []>} : vector<8x8xf32>, vector<8x32xf32>, vector<8x32xf32> -> vector<8x32xf32>
    %64 = arith.addf %46, %63 : vector<8x32xf32>
    %65 = vector.extract_strided_slice %6 {offsets = [0, 24], sizes = [8, 8], strides = [1, 1]} : vector<8x32xf32> to vector<8x8xf32>
    %66 = vector.extract_strided_slice %7 {offsets = [0, 24], sizes = [8, 8], strides = [1, 1]} : vector<8x32xf32> to vector<8x8xf32>
    %67 = vector.extract_strided_slice %8 {offsets = [0, 24], sizes = [8, 8], strides = [1, 1]} : vector<8x32xf32> to vector<8x8xf32>
    "tpu.trace_start"() <{level = 10 : i32, message = "qd,kd->qk"}> : () -> ()
    %cst_23 = arith.constant dense<0.000000e+00> : vector<8x8xf32>
    %68 = tpu.matmul %65, %66, %cst_23 {dimension_numbers = #tpu.dot_dimension_numbers<[1], [1], [0], [0], [0, 0, 1, 0], [], []>} : vector<8x8xf32>, vector<8x8xf32>, vector<8x8xf32> -> vector<8x8xf32>
    "tpu.trace_stop"() : () -> ()
    %cst_24 = arith.constant dense<0xFF800000> : vector<8xf32>
    %69 = vector.multi_reduction <maximumf>, %68, %cst_24 [1] : vector<8x8xf32> to vector<8xf32>
    %70 = vector.shape_cast %69 : vector<8xf32> to vector<8x1xf32>
    %71 = vector.broadcast %70 : vector<8x1xf32> to vector<8x8xf32>
    %72 = arith.subf %68, %71 : vector<8x8xf32>
    %73 = math.exp %72 : vector<8x8xf32>
    %cst_25 = arith.constant dense<0.000000e+00> : vector<8xf32>
    %74 = vector.multi_reduction <add>, %73, %cst_25 [1] : vector<8x8xf32> to vector<8xf32>
    %75 = vector.shape_cast %74 : vector<8xf32> to vector<8x1xf32>
    %76 = tpu.reciprocal %75 {approx = true} : vector<8x1xf32> -> vector<8x1xf32>
    %77 = vector.broadcast %76 : vector<8x1xf32> to vector<8x8xf32>
    %78 = arith.mulf %73, %77 : vector<8x8xf32>
    %79 = vector.extract_strided_slice %9 {offsets = [24, 0], sizes = [8, 32], strides = [1, 1]} : vector<32x32xf32> to vector<8x32xf32>
    %cst_26 = arith.constant dense<0.000000e+00> : vector<8x32xf32>
    %80 = tpu.matmul %67, %79, %cst_26 {dimension_numbers = #tpu.dot_dimension_numbers<[1], [0], [0], [1], [0, 0, 1, 1], [], []>} : vector<8x8xf32>, vector<8x32xf32>, vector<8x32xf32> -> vector<8x32xf32>
    %cst_27 = arith.constant dense<0.000000e+00> : vector<8x32xf32>
    %81 = tpu.matmul %78, %80, %cst_27 {dimension_numbers = #tpu.dot_dimension_numbers<[1], [0], [0], [1], [0, 0, 1, 1], [], []>} : vector<8x8xf32>, vector<8x32xf32>, vector<8x32xf32> -> vector<8x32xf32>
    %82 = arith.addf %64, %81 : vector<8x32xf32>
    %c0_28 = arith.constant 0 : index
    %c0_29 = arith.constant 0 : index
    %83 = vector.load %arg5[%c0_28, %c0_29] : memref<1x32xf32, #tpu.memory_space<vmem>>, vector<1x32xf32>
    %84 = vector.broadcast %83 : vector<1x32xf32> to vector<8x32xf32>
    %85 = arith.addf %82, %84 : vector<8x32xf32>
    %86 = arith.addf %0, %85 : vector<8x32xf32>
    %cst_30 = arith.constant dense<0.000000e+00> : vector<8xf32>
    %87 = vector.multi_reduction <add>, %86, %cst_30 [1] : vector<8x32xf32> to vector<8xf32>
    %88 = vector.shape_cast %87 : vector<8xf32> to vector<8x1xf32>
    %cst_31 = arith.constant 3.200000e+01 : f32
    %89 = vector.broadcast %cst_31 : f32 to vector<8x1xf32>
    %90 = arith.divf %88, %89 : vector<8x1xf32>
    %91 = arith.mulf %86, %86 : vector<8x32xf32>
    %cst_32 = arith.constant dense<0.000000e+00> : vector<8xf32>
    %92 = vector.multi_reduction <add>, %91, %cst_32 [1] : vector<8x32xf32> to vector<8xf32>
    %93 = vector.shape_cast %92 : vector<8xf32> to vector<8x1xf32>
    %cst_33 = arith.constant 3.200000e+01 : f32
    %94 = vector.broadcast %cst_33 : f32 to vector<8x1xf32>
    %95 = arith.divf %93, %94 : vector<8x1xf32>
    %96 = arith.mulf %90, %90 : vector<8x1xf32>
    %97 = arith.subf %95, %96 : vector<8x1xf32>
    %98 = vector.broadcast %90 : vector<8x1xf32> to vector<8x32xf32>
    %99 = arith.subf %86, %98 : vector<8x32xf32>
    %cst_34 = arith.constant 9.99999974E-6 : f32
    %100 = vector.broadcast %cst_34 : f32 to vector<8x1xf32>
    %101 = arith.addf %97, %100 : vector<8x1xf32>
    %102 = math.rsqrt %101 : vector<8x1xf32>
    %103 = vector.broadcast %102 : vector<8x1xf32> to vector<8x32xf32>
    %104 = arith.mulf %99, %103 : vector<8x32xf32>
    %c0_35 = arith.constant 0 : index
    %c0_36 = arith.constant 0 : index
    %105 = vector.load %arg6[%c0_35, %c0_36] : memref<1x32xf32, #tpu.memory_space<vmem>>, vector<1x32xf32>
    %106 = vector.broadcast %105 : vector<1x32xf32> to vector<8x32xf32>
    %107 = arith.mulf %104, %106 : vector<8x32xf32>
    %c0_37 = arith.constant 0 : index
    %c0_38 = arith.constant 0 : index
    %108 = vector.load %arg7[%c0_37, %c0_38] : memref<1x32xf32, #tpu.memory_space<vmem>>, vector<1x32xf32>
    %109 = vector.broadcast %108 : vector<1x32xf32> to vector<8x32xf32>
    %110 = arith.addf %107, %109 : vector<8x32xf32>
    %c0_39 = arith.constant 0 : index
    %c0_40 = arith.constant 0 : index
    %111 = vector.load %arg8[%c0_39, %c0_40] : memref<32x128xf32, #tpu.memory_space<vmem>>, vector<32x128xf32>
    %cst_41 = arith.constant dense<0.000000e+00> : vector<8x128xf32>
    %112 = tpu.matmul %110, %111, %cst_41 {dimension_numbers = #tpu.dot_dimension_numbers<[1], [0], [0], [1], [0, 0, 1, 1], [], []>} : vector<8x32xf32>, vector<32x128xf32>, vector<8x128xf32> -> vector<8x128xf32>
    %c0_42 = arith.constant 0 : index
    %c0_43 = arith.constant 0 : index
    %113 = vector.load %arg9[%c0_42, %c0_43] : memref<1x128xf32, #tpu.memory_space<vmem>>, vector<1x128xf32>
    %114 = vector.broadcast %113 : vector<1x128xf32> to vector<8x128xf32>
    %115 = arith.addf %112, %114 : vector<8x128xf32>
    %cst_44 = arith.constant 0.000000e+00 : f32
    %116 = vector.broadcast %cst_44 : f32 to vector<8x128xf32>
    %117 = arith.maximumf %115, %116 : vector<8x128xf32>
    %c0_45 = arith.constant 0 : index
    %c0_46 = arith.constant 0 : index
    %118 = vector.load %arg10[%c0_45, %c0_46] : memref<128x32xf32, #tpu.memory_space<vmem>>, vector<128x32xf32>
    %cst_47 = arith.constant dense<0.000000e+00> : vector<8x32xf32>
    %119 = tpu.matmul %117, %118, %cst_47 {dimension_numbers = #tpu.dot_dimension_numbers<[1], [0], [0], [1], [0, 0, 1, 1], [], []>} : vector<8x128xf32>, vector<128x32xf32>, vector<8x32xf32> -> vector<8x32xf32>
    %c0_48 = arith.constant 0 : index
    %c0_49 = arith.constant 0 : index
    %120 = vector.load %arg11[%c0_48, %c0_49] : memref<1x32xf32, #tpu.memory_space<vmem>>, vector<1x32xf32>
    %121 = vector.broadcast %120 : vector<1x32xf32> to vector<8x32xf32>
    %122 = arith.addf %119, %121 : vector<8x32xf32>
    %123 = arith.addf %110, %122 : vector<8x32xf32>
    %cst_50 = arith.constant dense<0.000000e+00> : vector<8xf32>
    %124 = vector.multi_reduction <add>, %123, %cst_50 [1] : vector<8x32xf32> to vector<8xf32>
    %125 = vector.shape_cast %124 : vector<8xf32> to vector<8x1xf32>
    %cst_51 = arith.constant 3.200000e+01 : f32
    %126 = vector.broadcast %cst_51 : f32 to vector<8x1xf32>
    %127 = arith.divf %125, %126 : vector<8x1xf32>
    %128 = arith.mulf %123, %123 : vector<8x32xf32>
    %cst_52 = arith.constant dense<0.000000e+00> : vector<8xf32>
    %129 = vector.multi_reduction <add>, %128, %cst_52 [1] : vector<8x32xf32> to vector<8xf32>
    %130 = vector.shape_cast %129 : vector<8xf32> to vector<8x1xf32>
    %cst_53 = arith.constant 3.200000e+01 : f32
    %131 = vector.broadcast %cst_53 : f32 to vector<8x1xf32>
    %132 = arith.divf %130, %131 : vector<8x1xf32>
    %133 = arith.mulf %127, %127 : vector<8x1xf32>
    %134 = arith.subf %132, %133 : vector<8x1xf32>
    %135 = vector.broadcast %127 : vector<8x1xf32> to vector<8x32xf32>
    %136 = arith.subf %123, %135 : vector<8x32xf32>
    %cst_54 = arith.constant 9.99999974E-6 : f32
    %137 = vector.broadcast %cst_54 : f32 to vector<8x1xf32>
    %138 = arith.addf %134, %137 : vector<8x1xf32>
    %139 = math.rsqrt %138 : vector<8x1xf32>
    %140 = vector.broadcast %139 : vector<8x1xf32> to vector<8x32xf32>
    %141 = arith.mulf %136, %140 : vector<8x32xf32>
    %c0_55 = arith.constant 0 : index
    %c0_56 = arith.constant 0 : index
    %142 = vector.load %arg12[%c0_55, %c0_56] : memref<1x32xf32, #tpu.memory_space<vmem>>, vector<1x32xf32>
    %143 = vector.broadcast %142 : vector<1x32xf32> to vector<8x32xf32>
    %144 = arith.mulf %141, %143 : vector<8x32xf32>
    %c0_57 = arith.constant 0 : index
    %c0_58 = arith.constant 0 : index
    %145 = vector.load %arg13[%c0_57, %c0_58] : memref<1x32xf32, #tpu.memory_space<vmem>>, vector<1x32xf32>
    %146 = vector.broadcast %145 : vector<1x32xf32> to vector<8x32xf32>
    %147 = arith.addf %144, %146 : vector<8x32xf32>
    %c0_59 = arith.constant 0 : index
    %c0_60 = arith.constant 0 : index
    %148 = vector.load %arg14[%c0_59, %c0_60] : memref<8x32xf32, #tpu.memory_space<vmem>>, vector<8x32xf32>
    tpu.vector_store %arg14[%c0_59, %c0_60], %147 {strides = array<i32>} : memref<8x32xf32, #tpu.memory_space<vmem>>, vector<8x32xf32>,
    return
  }
  func.func @transform_0(%arg0: i32) -> (i32, i32) {
    %c0_i32 = arith.constant 0 : i32
    %c0_i32_0 = arith.constant 0 : i32
    return %arg0, %c0_i32 : i32, i32
  }
  func.func @transform_1(%arg0: i32) -> (i32, i32) {
    %c0_i32 = arith.constant 0 : i32
    %c0_i32_0 = arith.constant 0 : i32
    %c0_i32_1 = arith.constant 0 : i32
    return %c0_i32, %c0_i32_0 : i32, i32
  }
  func.func @transform_2(%arg0: i32) -> (i32, i32) {
    %c0_i32 = arith.constant 0 : i32
    %c0_i32_0 = arith.constant 0 : i32
    %c0_i32_1 = arith.constant 0 : i32
    return %c0_i32, %c0_i32_0 : i32, i32
  }
  func.func @transform_3(%arg0: i32) -> (i32, i32) {
    %c0_i32 = arith.constant 0 : i32
    %c0_i32_0 = arith.constant 0 : i32
    %c0_i32_1 = arith.constant 0 : i32
    return %c0_i32, %c0_i32_0 : i32, i32
  }
  func.func @transform_4(%arg0: i32) -> (i32, i32) {
    %c0_i32 = arith.constant 0 : i32
    %c0_i32_0 = arith.constant 0 : i32
    %c0_i32_1 = arith.constant 0 : i32
    return %c0_i32, %c0_i32_0 : i32, i32
  }
  func.func @transform_5(%arg0: i32) -> (i32, i32) {
    %c0_i32 = arith.constant 0 : i32
    %c0_i32_0 = arith.constant 0 : i32
    %c0_i32_1 = arith.constant 0 : i32
    return %c0_i32, %c0_i32_0 : i32, i32
  }
  func.func @transform_6(%arg0: i32) -> (i32, i32) {
    %c0_i32 = arith.constant 0 : i32
    %c0_i32_0 = arith.constant 0 : i32
    %c0_i32_1 = arith.constant 0 : i32
    return %c0_i32, %c0_i32_0 : i32, i32
  }
  func.func @transform_7(%arg0: i32) -> (i32, i32) {
    %c0_i32 = arith.constant 0 : i32
    %c0_i32_0 = arith.constant 0 : i32
    %c0_i32_1 = arith.constant 0 : i32
    return %c0_i32, %c0_i32_0 : i32, i32
  }
  func.func @transform_8(%arg0: i32) -> (i32, i32) {
    %c0_i32 = arith.constant 0 : i32
    %c0_i32_0 = arith.constant 0 : i32
    %c0_i32_1 = arith.constant 0 : i32
    return %c0_i32, %c0_i32_0 : i32, i32
  }
  func.func @transform_9(%arg0: i32) -> (i32, i32) {
    %c0_i32 = arith.constant 0 : i32
    %c0_i32_0 = arith.constant 0 : i32
    %c0_i32_1 = arith.constant 0 : i32
    return %c0_i32, %c0_i32_0 : i32, i32
  }
  func.func @transform_10(%arg0: i32) -> (i32, i32) {
    %c0_i32 = arith.constant 0 : i32
    %c0_i32_0 = arith.constant 0 : i32
    %c0_i32_1 = arith.constant 0 : i32
    return %c0_i32, %c0_i32_0 : i32, i32
  }
  func.func @transform_11(%arg0: i32) -> (i32, i32) {
    %c0_i32 = arith.constant 0 : i32
    %c0_i32_0 = arith.constant 0 : i32
    %c0_i32_1 = arith.constant 0 : i32
    return %c0_i32, %c0_i32_0 : i32, i32
  }
  func.func @transform_12(%arg0: i32) -> (i32, i32) {
    %c0_i32 = arith.constant 0 : i32
    %c0_i32_0 = arith.constant 0 : i32
    %c0_i32_1 = arith.constant 0 : i32
    return %c0_i32, %c0_i32_0 : i32, i32
  }
  func.func @transform_13(%arg0: i32) -> (i32, i32) {
    %c0_i32 = arith.constant 0 : i32
    %c0_i32_0 = arith.constant 0 : i32
    return %arg0, %c0_i32 : i32, i32
  }
}

</mosaic_0001>

<llo_original>
// kernel: tpu_custom_call.1
$region0: #{tpu_custom_call.1}
  #allocation0 [shape = 'u32[]', space=smem, size = 0x4, offset = 0x4, fixed_abs, tag = 'smem constant byte address 0x4 - core index']
  #allocation1 [shape = 'u32[144,128]{1,0:T(1,128)}', space=vmem, size = 0x12000, scoped, tag = 'internal scratch']
  %s0 = inlined_call_operand.vmem [shape: f32[16,32], index: 0, kind: input, shape index: {}]
  %s1 = inlined_call_operand.vmem [shape: f32[32,96], index: 1, kind: input, shape index: {}]
  %s2 = inlined_call_operand.vmem [shape: f32[1,96], index: 2, kind: input, shape index: {}]
  %s3 = inlined_call_operand.vmem [shape: f32[32,32], index: 3, kind: input, shape index: {}]
  %s4 = inlined_call_operand.vmem [shape: f32[1,32], index: 4, kind: input, shape index: {}]
  %s5 = inlined_call_operand.vmem [shape: f32[1,32], index: 5, kind: input, shape index: {}]
  %s6 = inlined_call_operand.vmem [shape: f32[1,32], index: 6, kind: input, shape index: {}]
  %s7 = inlined_call_operand.vmem [shape: f32[32,128], index: 7, kind: input, shape index: {}]
  %s8 = inlined_call_operand.vmem [shape: f32[1,128], index: 8, kind: input, shape index: {}]
  %s9 = inlined_call_operand.vmem [shape: f32[128,32], index: 9, kind: input, shape index: {}]
  %s10 = inlined_call_operand.vmem [shape: f32[1,32], index: 10, kind: input, shape index: {}]
  %s11 = inlined_call_operand.vmem [shape: f32[1,32], index: 11, kind: input, shape index: {}]
  %s12 = inlined_call_operand.vmem [shape: f32[1,32], index: 12, kind: input, shape index: {}]
  %s13 = inlined_call_operand.hbm [shape: f32[16,32], index: 13, kind: output, shape index: {}]
  %s14 = sld [smem:[#allocation0]]
  $region85: #{tpu_custom_call.1} parent=0
    _
  %s16 = ssub.s32 1, %s14
  %s17 = scalar_select 0, %s16, %s14
  $region1: #{tpu_custom_call.1} parent=0
    #allocation2 [shape = 'u8[8192]{0}', space=vmem, size = 0x2000, scoped, tag = 'output window, operand 0']
    #allocation3 [shape = 's32[2]{0}', space=sflag, size = 0x8, scoped, tag = 'scoped memory for tpu_custom_call.1']
    %18 = vsyncpa [#allocation3], 0
    %s19 = scalar_lea.sflag [#allocation3], 1
    %20 = vsyncpa %s19, 0
    loop: start=0, step=1, limit=4
    $region2: #{tpu_custom_call.1} parent=1 // loop_pre_header
      _
    $region3: #{tpu_custom_call.1} parent=1 // loop_header
      %s22 = sphi 0, %s26
      %p23 = scmp.ge.s32.totalorder %s22, 4
      %s32 = sphi 0, %s34
      %s35 = sphi 0, %s32
      %s36 = sphi 0, %s35
      %s52 = sphi 0, %s36
      %s56 = sphi 0, %s56
      %s58 = sphi 0, %s56
      %s59 = sphi 0, %s58
      %s73 = sphi 0, %s59
      %s77 = sphi 0, %s77
      %s79 = sphi 0, %s77
      %s80 = sphi 0, %s79
      %s94 = sphi 0, %s80
      %s98 = sphi 0, %s98
      %s100 = sphi 0, %s98
      %s101 = sphi 0, %s100
      %s115 = sphi 0, %s101
      %s119 = sphi 0, %s119
      %s121 = sphi 0, %s119
      %s122 = sphi 0, %s121
      %s136 = sphi 0, %s122
      %s140 = sphi 0, %s140
      %s142 = sphi 0, %s140
      %s143 = sphi 0, %s142
      %s157 = sphi 0, %s143
      %s161 = sphi 0, %s161
      %s163 = sphi 0, %s161
      %s164 = sphi 0, %s163
      %s178 = sphi 0, %s164
      %s182 = sphi 0, %s182
      %s184 = sphi 0, %s182
      %s185 = sphi 0, %s184
      %s199 = sphi 0, %s185
      %s203 = sphi 0, %s203
      %s205 = sphi 0, %s203
      %s206 = sphi 0, %s205
      %s220 = sphi 0, %s206
      %s224 = sphi 0, %s224
      %s226 = sphi 0, %s224
      %s227 = sphi 0, %s226
      %s241 = sphi 0, %s227
      %s245 = sphi 0, %s245
      %s247 = sphi 0, %s245
      %s248 = sphi 0, %s247
      %s262 = sphi 0, %s248
      %s266 = sphi 0, %s266
      %s268 = sphi 0, %s266
      %s269 = sphi 0, %s268
      %s283 = sphi 0, %s269
      %s287 = sphi 0, %s287
      %s289 = sphi 0, %s287
      %s290 = sphi 0, %s289
      %s304 = sphi 0, %s290
      %s310 = sphi 0, %s312
      %s313 = sphi 0, %s310
      %s314 = sphi 0, %s313
      %s330 = sphi 0, %s314
    $region4: #{tpu_custom_call.1} parent=1 // loop_header_branch
      %25 = sbr.rel (%p23) target = $region8
    $region5: #{tpu_custom_call.1} parent=1 // loop_body
      %s27 = ssub.s32 %s22, 1
      %s28 = ssub.s32 %s22, 2
      %s29 = sadd.s32 %s22, 1
      %s30 = ssub.s32 %s22, %s29
      %p31 = scmp.eq.s32.totalorder %s30, 0
      %s33 = sadd.s32 %s32, 1
      %s34 = scalar_select %p31, %s32, %s33
      %p37 = pneg %p31
      %p38 = scmp.eq.s32.totalorder %s22, 1
      %p39 = por %p37, %p38
      %p40 = scmp.ne.s32.totalorder %s32, %s35
      %p41 = scmp.eq.s32.totalorder %s22, 0
      %p42 = por %p40, %p41
      %p43 = scmp.ne.s32.totalorder %s32, %s35
      %p44 = scmp.eq.s32.totalorder %s27, 1
      %p45 = por %p43, %p44
      %p46 = scmp.ne.s32.totalorder %s35, %s36
      %p47 = scmp.eq.s32.totalorder %s27, 0
      %p48 = por %p46, %p47
      %p49 = scmp.ne.s32.totalorder %s35, %s36
      %p50 = scmp.eq.s32.totalorder %s28, 1
      %p51 = por %p49, %p50
      %p53 = scmp.ne.s32.totalorder %s36, %s52
      %p54 = scmp.eq.s32.totalorder %s28, 0
      %p55 = por %p53, %p54
      %s57 = sadd.s32 %s56, 1
      %p60 = scmp.eq.s32.totalorder %s22, 1
      %p61 = scmp.ne.s32.totalorder %s56, %s58
      %p62 = scmp.eq.s32.totalorder %s22, 0
      %p63 = por %p61, %p62
      %p64 = scmp.ne.s32.totalorder %s56, %s58
      %p65 = scmp.eq.s32.totalorder %s27, 1
      %p66 = por %p64, %p65
      %p67 = scmp.ne.s32.totalorder %s58, %s59
      %p68 = scmp.eq.s32.totalorder %s27, 0
      %p69 = por %p67, %p68
      %p70 = scmp.ne.s32.totalorder %s58, %s59
      %p71 = scmp.eq.s32.totalorder %s28, 1
      %p72 = por %p70, %p71
      %p74 = scmp.ne.s32.totalorder %s59, %s73
      %p75 = scmp.eq.s32.totalorder %s28, 0
      %p76 = por %p74, %p75
      %s78 = sadd.s32 %s77, 1
      %p81 = scmp.eq.s32.totalorder %s22, 1
      %p82 = scmp.ne.s32.totalorder %s77, %s79
      %p83 = scmp.eq.s32.totalorder %s22, 0
      %p84 = por %p82, %p83
      %p85 = scmp.ne.s32.totalorder %s77, %s79
      %p86 = scmp.eq.s32.totalorder %s27, 1
      %p87 = por %p85, %p86
      %p88 = scmp.ne.s32.totalorder %s79, %s80
      %p89 = scmp.eq.s32.totalorder %s27, 0
      %p90 = por %p88, %p89
      %p91 = scmp.ne.s32.totalorder %s79, %s80
      %p92 = scmp.eq.s32.totalorder %s28, 1
      %p93 = por %p91, %p92
      %p95 = scmp.ne.s32.totalorder %s80, %s94
      %p96 = scmp.eq.s32.totalorder %s28, 0
      %p97 = por %p95, %p96
      %s99 = sadd.s32 %s98, 1
      %p102 = scmp.eq.s32.totalorder %s22, 1
      %p103 = scmp.ne.s32.totalorder %s98, %s100
      %p104 = scmp.eq.s32.totalorder %s22, 0
      %p105 = por %p103, %p104
      %p106 = scmp.ne.s32.totalorder %s98, %s100
      %p107 = scmp.eq.s32.totalorder %s27, 1
      %p108 = por %p106, %p107
      %p109 = scmp.ne.s32.totalorder %s100, %s101
      %p110 = scmp.eq.s32.totalorder %s27, 0
      %p111 = por %p109, %p110
      %p112 = scmp.ne.s32.totalorder %s100, %s101
      %p113 = scmp.eq.s32.totalorder %s28, 1
      %p114 = por %p112, %p113
      %p116 = scmp.ne.s32.totalorder %s101, %s115
      %p117 = scmp.eq.s32.totalorder %s28, 0
      %p118 = por %p116, %p117
      %s120 = sadd.s32 %s119, 1
      %p123 = scmp.eq.s32.totalorder %s22, 1
      %p124 = scmp.ne.s32.totalorder %s119, %s121
      %p125 = scmp.eq.s32.totalorder %s22, 0
      %p126 = por %p124, %p125
      %p127 = scmp.ne.s32.totalorder %s119, %s121
      %p128 = scmp.eq.s32.totalorder %s27, 1
      %p129 = por %p127, %p128
      %p130 = scmp.ne.s32.totalorder %s121, %s122
      %p131 = scmp.eq.s32.totalorder %s27, 0
      %p132 = por %p130, %p131
      %p133 = scmp.ne.s32.totalorder %s121, %s122
      %p134 = scmp.eq.s32.totalorder %s28, 1
      %p135 = por %p133, %p134
      %p137 = scmp.ne.s32.totalorder %s122, %s136
      %p138 = scmp.eq.s32.totalorder %s28, 0
      %p139 = por %p137, %p138
      %s141 = sadd.s32 %s140, 1
      %p144 = scmp.eq.s32.totalorder %s22, 1
      %p145 = scmp.ne.s32.totalorder %s140, %s142
      %p146 = scmp.eq.s32.totalorder %s22, 0
      %p147 = por %p145, %p146
      %p148 = scmp.ne.s32.totalorder %s140, %s142
      %p149 = scmp.eq.s32.totalorder %s27, 1
      %p150 = por %p148, %p149
      %p151 = scmp.ne.s32.totalorder %s142, %s143
      %p152 = scmp.eq.s32.totalorder %s27, 0
      %p153 = por %p151, %p152
      %p154 = scmp.ne.s32.totalorder %s142, %s143
      %p155 = scmp.eq.s32.totalorder %s28, 1
      %p156 = por %p154, %p155
      %p158 = scmp.ne.s32.totalorder %s143, %s157
      %p159 = scmp.eq.s32.totalorder %s28, 0
      %p160 = por %p158, %p159
      %s162 = sadd.s32 %s161, 1
      %p165 = scmp.eq.s32.totalorder %s22, 1
      %p166 = scmp.ne.s32.totalorder %s161, %s163
      %p167 = scmp.eq.s32.totalorder %s22, 0
      %p168 = por %p166, %p167
      %p169 = scmp.ne.s32.totalorder %s161, %s163
      %p170 = scmp.eq.s32.totalorder %s27, 1
      %p171 = por %p169, %p170
      %p172 = scmp.ne.s32.totalorder %s163, %s164
      %p173 = scmp.eq.s32.totalorder %s27, 0
      %p174 = por %p172, %p173
      %p175 = scmp.ne.s32.totalorder %s163, %s164
      %p176 = scmp.eq.s32.totalorder %s28, 1
      %p177 = por %p175, %p176
      %p179 = scmp.ne.s32.totalorder %s164, %s178
      %p180 = scmp.eq.s32.totalorder %s28, 0
      %p181 = por %p179, %p180
      %s183 = sadd.s32 %s182, 1
      %p186 = scmp.eq.s32.totalorder %s22, 1
      %p187 = scmp.ne.s32.totalorder %s182, %s184
      %p188 = scmp.eq.s32.totalorder %s22, 0
      %p189 = por %p187, %p188
      %p190 = scmp.ne.s32.totalorder %s182, %s184
      %p191 = scmp.eq.s32.totalorder %s27, 1
      %p192 = por %p190, %p191
      %p193 = scmp.ne.s32.totalorder %s184, %s185
      %p194 = scmp.eq.s32.totalorder %s27, 0
      %p195 = por %p193, %p194
      %p196 = scmp.ne.s32.totalorder %s184, %s185
      %p197 = scmp.eq.s32.totalorder %s28, 1
      %p198 = por %p196, %p197
      %p200 = scmp.ne.s32.totalorder %s185, %s199
      %p201 = scmp.eq.s32.totalorder %s28, 0
      %p202 = por %p200, %p201
      %s204 = sadd.s32 %s203, 1
      %p207 = scmp.eq.s32.totalorder %s22, 1
      %p208 = scmp.ne.s32.totalorder %s203, %s205
      %p209 = scmp.eq.s32.totalorder %s22, 0
      %p210 = por %p208, %p209
      %p211 = scmp.ne.s32.totalorder %s203, %s205
      %p212 = scmp.eq.s32.totalorder %s27, 1
      %p213 = por %p211, %p212
      %p214 = scmp.ne.s32.totalorder %s205, %s206
      %p215 = scmp.eq.s32.totalorder %s27, 0
      %p216 = por %p214, %p215
      %p217 = scmp.ne.s32.totalorder %s205, %s206
      %p218 = scmp.eq.s32.totalorder %s28, 1
      %p219 = por %p217, %p218
      %p221 = scmp.ne.s32.totalorder %s206, %s220
      %p222 = scmp.eq.s32.totalorder %s28, 0
      %p223 = por %p221, %p222
      %s225 = sadd.s32 %s224, 1
      %p228 = scmp.eq.s32.totalorder %s22, 1
      %p229 = scmp.ne.s32.totalorder %s224, %s226
      %p230 = scmp.eq.s32.totalorder %s22, 0
      %p231 = por %p229, %p230
      %p232 = scmp.ne.s32.totalorder %s224, %s226
      %p233 = scmp.eq.s32.totalorder %s27, 1
      %p234 = por %p232, %p233
      %p235 = scmp.ne.s32.totalorder %s226, %s227
      %p236 = scmp.eq.s32.totalorder %s27, 0
      %p237 = por %p235, %p236
      %p238 = scmp.ne.s32.totalorder %s226, %s227
      %p239 = scmp.eq.s32.totalorder %s28, 1
      %p240 = por %p238, %p239
      %p242 = scmp.ne.s32.totalorder %s227, %s241
      %p243 = scmp.eq.s32.totalorder %s28, 0
      %p244 = por %p242, %p243
      %s246 = sadd.s32 %s245, 1
      %p249 = scmp.eq.s32.totalorder %s22, 1
      %p250 = scmp.ne.s32.totalorder %s245, %s247
      %p251 = scmp.eq.s32.totalorder %s22, 0
      %p252 = por %p250, %p251
      %p253 = scmp.ne.s32.totalorder %s245, %s247
      %p254 = scmp.eq.s32.totalorder %s27, 1
      %p255 = por %p253, %p254
      %p256 = scmp.ne.s32.totalorder %s247, %s248
      %p257 = scmp.eq.s32.totalorder %s27, 0
      %p258 = por %p256, %p257
      %p259 = scmp.ne.s32.totalorder %s247, %s248
      %p260 = scmp.eq.s32.totalorder %s28, 1
      %p261 = por %p259, %p260
      %p263 = scmp.ne.s32.totalorder %s248, %s262
      %p264 = scmp.eq.s32.totalorder %s28, 0
      %p265 = por %p263, %p264
      %s267 = sadd.s32 %s266, 1
      %p270 = scmp.eq.s32.totalorder %s22, 1
      %p271 = scmp.ne.s32.totalorder %s266, %s268
      %p272 = scmp.eq.s32.totalorder %s22, 0
      %p273 = por %p271, %p272
      %p274 = scmp.ne.s32.totalorder %s266, %s268
      %p275 = scmp.eq.s32.totalorder %s27, 1
      %p276 = por %p274, %p275
      %p277 = scmp.ne.s32.totalorder %s268, %s269
      %p278 = scmp.eq.s32.totalorder %s27, 0
      %p279 = por %p277, %p278
      %p280 = scmp.ne.s32.totalorder %s268, %s269
      %p281 = scmp.eq.s32.totalorder %s28, 1
      %p282 = por %p280, %p281
      %p284 = scmp.ne.s32.totalorder %s269, %s283
      %p285 = scmp.eq.s32.totalorder %s28, 0
      %p286 = por %p284, %p285
      %s288 = sadd.s32 %s287, 1
      %p291 = scmp.eq.s32.totalorder %s22, 1
      %p292 = scmp.ne.s32.totalorder %s287, %s289
      %p293 = scmp.eq.s32.totalorder %s22, 0
      %p294 = por %p292, %p293
      %p295 = scmp.ne.s32.totalorder %s287, %s289
      %p296 = scmp.eq.s32.totalorder %s27, 1
      %p297 = por %p295, %p296
      %p298 = scmp.ne.s32.totalorder %s289, %s290
      %p299 = scmp.eq.s32.totalorder %s27, 0
      %p300 = por %p298, %p299
      %p301 = scmp.ne.s32.totalorder %s289, %s290
      %p302 = scmp.eq.s32.totalorder %s28, 1
      %p303 = por %p301, %p302
      %p305 = scmp.ne.s32.totalorder %s290, %s304
      %p306 = scmp.eq.s32.totalorder %s28, 0
      %p307 = por %p305, %p306
      %s308 = ssub.s32 %s22, %s29
      %p309 = scmp.eq.s32.totalorder %s308, 0
      %s311 = sadd.s32 %s310, 1
      %s312 = scalar_select %p309, %s310, %s311
      %p315 = pneg %p309
      %p316 = scmp.eq.s32.totalorder %s22, 1
      %p317 = por %p315, %p316
      %p318 = scmp.ne.s32.totalorder %s310, %s313
      %p319 = scmp.eq.s32.totalorder %s22, 0
      %p320 = por %p318, %p319
      %p321 = scmp.ne.s32.totalorder %s310, %s313
      %p322 = scmp.eq.s32.totalorder %s27, 1
      %p323 = por %p321, %p322
      %p324 = scmp.ne.s32.totalorder %s313, %s314
      %p325 = scmp.eq.s32.totalorder %s27, 0
      %p326 = por %p324, %p325
      %p327 = scmp.ne.s32.totalorder %s313, %s314
      %p328 = scmp.eq.s32.totalorder %s28, 1
      %p329 = por %p327, %p328
      %p331 = scmp.ne.s32.totalorder %s314, %s330
      %p332 = scmp.eq.s32.totalorder %s28, 0
      %p333 = por %p331, %p332
      %p334 = scmp.le.s32.totalorder 1, %s22
      %p335 = scmp.lt.s32.totalorder %s22, 3
      %p336 = pnand %p334, %p335
      %p337 = pneg %p336
      // Predicated region
      $region9: #{tpu_custom_call.1} parent=5 // pred_check
        _
      $region10: #{tpu_custom_call.1} parent=5 // pred_check_branch
        %339 = sbr.rel (%p336) target = $region12
      $region11: #{tpu_custom_call.1} parent=5 // pred_region
        %s340 = ssub.s32 %s22, 1
        // Predicated region
        $region13: #{tpu_custom_call.1} parent=11 // pred_check
          %p341 = pneg %p69
        $region14: #{tpu_custom_call.1} parent=11 // pred_check_branch
          %343 = sbr.rel (%p341) target = $region16
        $region15: #{tpu_custom_call.1} parent=11 // pred_region
          _
        $region16: #{tpu_custom_call.1} parent=11 // pred_fallthru
          _
        // Predicated region
        $region17: #{tpu_custom_call.1} parent=11 // pred_check
          %p344 = pneg %p90
        $region18: #{tpu_custom_call.1} parent=11 // pred_check_branch
          %346 = sbr.rel (%p344) target = $region20
        $region19: #{tpu_custom_call.1} parent=11 // pred_region
          _
        $region20: #{tpu_custom_call.1} parent=11 // pred_fallthru
          _
        // Predicated region
        $region21: #{tpu_custom_call.1} parent=11 // pred_check
          %p347 = pneg %p111
        $region22: #{tpu_custom_call.1} parent=11 // pred_check_branch
          %349 = sbr.rel (%p347) target = $region24
        $region23: #{tpu_custom_call.1} parent=11 // pred_region
          _
        $region24: #{tpu_custom_call.1} parent=11 // pred_fallthru
          _
        // Predicated region
        $region25: #{tpu_custom_call.1} parent=11 // pred_check
          %p350 = pneg %p132
        $region26: #{tpu_custom_call.1} parent=11 // pred_check_branch
          %352 = sbr.rel (%p350) target = $region28
        $region27: #{tpu_custom_call.1} parent=11 // pred_region
          _
        $region28: #{tpu_custom_call.1} parent=11 // pred_fallthru
          _
        // Predicated region
        $region29: #{tpu_custom_call.1} parent=11 // pred_check
          %p353 = pneg %p153
        $region30: #{tpu_custom_call.1} parent=11 // pred_check_branch
          %355 = sbr.rel (%p353) target = $region32
        $region31: #{tpu_custom_call.1} parent=11 // pred_region
          _
        $region32: #{tpu_custom_call.1} parent=11 // pred_fallthru
          _
        // Predicated region
        $region33: #{tpu_custom_call.1} parent=11 // pred_check
          %p356 = pneg %p174
        $region34: #{tpu_custom_call.1} parent=11 // pred_check_branch
          %358 = sbr.rel (%p356) target = $region36
        $region35: #{tpu_custom_call.1} parent=11 // pred_region
          _
        $region36: #{tpu_custom_call.1} parent=11 // pred_fallthru
          _
        // Predicated region
        $region37: #{tpu_custom_call.1} parent=11 // pred_check
          %p359 = pneg %p195
        $region38: #{tpu_custom_call.1} parent=11 // pred_check_branch
          %361 = sbr.rel (%p359) target = $region40
        $region39: #{tpu_custom_call.1} parent=11 // pred_region
          _
        $region40: #{tpu_custom_call.1} parent=11 // pred_fallthru
          _
        // Predicated region
        $region41: #{tpu_custom_call.1} parent=11 // pred_check
          %p362 = pneg %p216
        $region42: #{tpu_custom_call.1} parent=11 // pred_check_branch
          %364 = sbr.rel (%p362) target = $region44
        $region43: #{tpu_custom_call.1} parent=11 // pred_region
          _
        $region44: #{tpu_custom_call.1} parent=11 // pred_fallthru
          _
        // Predicated region
        $region45: #{tpu_custom_call.1} parent=11 // pred_check
          %p365 = pneg %p237
        $region46: #{tpu_custom_call.1} parent=11 // pred_check_branch
          %367 = sbr.rel (%p365) target = $region48
        $region47: #{tpu_custom_call.1} parent=11 // pred_region
          _
        $region48: #{tpu_custom_call.1} parent=11 // pred_fallthru
          _
        // Predicated region
        $region49: #{tpu_custom_call.1} parent=11 // pred_check
          %p368 = pneg %p258
        $region50: #{tpu_custom_call.1} parent=11 // pred_check_branch
          %370 = sbr.rel (%p368) target = $region52
        $region51: #{tpu_custom_call.1} parent=11 // pred_region
          _
        $region52: #{tpu_custom_call.1} parent=11 // pred_fallthru
          _
        // Predicated region
        $region53: #{tpu_custom_call.1} parent=11 // pred_check
          %p371 = pneg %p279
        $region54: #{tpu_custom_call.1} parent=11 // pred_check_branch
          %373 = sbr.rel (%p371) target = $region56
        $region55: #{tpu_custom_call.1} parent=11 // pred_region
          _
        $region56: #{tpu_custom_call.1} parent=11 // pred_fallthru
          _
        // Predicated region
        $region57: #{tpu_custom_call.1} parent=11 // pred_check
          %p374 = pneg %p300
        $region58: #{tpu_custom_call.1} parent=11 // pred_check_branch
          %376 = sbr.rel (%p374) target = $region60
        $region59: #{tpu_custom_call.1} parent=11 // pred_region
          _
        $region60: #{tpu_custom_call.1} parent=11 // pred_fallthru
          _
      $region12: #{tpu_custom_call.1} parent=5 // pred_fallthru
        _
      %p377 = scmp.lt.s32.totalorder %s22, 2
      // Predicated region
      $region61: #{tpu_custom_call.1} parent=5 // pred_check
        %p378 = pneg %p377
      $region62: #{tpu_custom_call.1} parent=5 // pred_check_branch
        %380 = sbr.rel (%p378) target = $region64
      $region63: #{tpu_custom_call.1} parent=5 // pred_region
        // Predicated region
        $region65: #{tpu_custom_call.1} parent=63 // pred_check
          %p381 = pneg %p42
        $region66: #{tpu_custom_call.1} parent=63 // pred_check_branch
          %383 = sbr.rel (%p381) target = $region68
        $region67: #{tpu_custom_call.1} parent=63 // pred_region
          %p384 = scmp.lt.s32.totalorder %s22, 1
          %s385 = scalar_select %p384, %s22, 1
          %s386 = smul.addr %s385, 8
          %s387 = scalar_lea.vmem %s0, %s386
        $region68: #{tpu_custom_call.1} parent=63 // pred_fallthru
          _
      $region64: #{tpu_custom_call.1} parent=5 // pred_fallthru
        _
      %p388 = scmp.le.s32.totalorder 1, %s22
      %p389 = scmp.lt.s32.totalorder %s22, 3
      %p390 = pnand %p388, %p389
      %p391 = pneg %p390
      // Predicated region
      $region69: #{tpu_custom_call.1} parent=5 // pred_check
        _
      $region70: #{tpu_custom_call.1} parent=5 // pred_check_branch
        %393 = sbr.rel (%p390) target = $region72
      $region71: #{tpu_custom_call.1} parent=5 // pred_region
        %s394 = ssub.s32 %s22, 1
        %p395 = scmp.lt.s32.totalorder %s27, 1
        %s396 = scalar_select %p395, %s27, 1
        %s397 = smul.addr %s396, 8
        %s398 = scalar_lea.vmem %s0, %s397
        %p399 = pneg %p48
        %p400 = pneg %p45
        %p401 = pneg %p69
        %p402 = pneg %p66
        %p403 = pneg %p90
        %p404 = pneg %p87
        %p405 = pneg %p111
        %p406 = pneg %p108
        %p407 = pneg %p132
        %p408 = pneg %p129
        %p409 = pneg %p153
        %p410 = pneg %p150
        %p411 = pneg %p174
        %p412 = pneg %p171
        %p413 = pneg %p195
        %p414 = pneg %p192
        %p415 = pneg %p216
        %p416 = pneg %p213
        %p417 = pneg %p237
        %p418 = pneg %p234
        %p419 = pneg %p258
        %p420 = pneg %p255
        %p421 = pneg %p279
        %p422 = pneg %p276
        %p423 = pneg %p300
        %p424 = pneg %p297
        %p425 = pneg %p326
        %p426 = pneg %p323
        %s427 = sand.u32 %s313, 1
        %s428 = scalar_lea.sflag [#allocation3], %s427
        %s429 = sand.u32 %s313, 1
        %s430 = smul.addr %s429, 8
        %s431 = scalar_lea.vmem [#allocation2], %s430
        %p432 = scmp.lt.s32.totalorder %s27, 1
        %s433 = scalar_select %p432, %s27, 1
        %s434 = smul.addr %s433, 8
        %s435 = scalar_lea.vmem %s0, %s434
        %v436 = vld [vmem:[%s435] sm:$0xff]
        %v437 = vld [vmem:[%s1] sm:$0xff]
        %v438 = vld [vmem:[%s1 + $0x8] sm:$0xff]
        %v439 = vld [vmem:[%s1 + $0x10] sm:$0xff]
        %v440 = vld [vmem:[%s1 + $0x18] sm:$0xff]
        %v441 = vld [vmem:[%s2] sm:$0x1]
        %v443 = vlaneseq
        %v444 = vshrl.u32 %v443, 7
        %v445 = vsub.s32 0, %v444
        %v446 = vrot.slane %v441, %v445
        %vm448 = vcmask 261120
        %v450 = vsel %vm448, %v436, 0
        %452 = vmatprep.subr.mxu0 0.0
        %453 = vmatpush1.msra.mxu0 %v437
        %454 = vmatprep.subr.mxu0 0.0
        %455 = vmatpush1.msra.mxu0 %v438
        %456 = vmatprep.subr.mxu0 0.0
        %457 = vmatpush1.msra.mxu0 %v439
        %458 = vmatprep.subr.mxu0 0.0
        %459 = vmatpush1.msra.mxu0 %v440
        %460 = vmatprep.subr.mxu0 0.0
        %461 = vmatpush1.msra.mxu0 0.0
        %462 = vmatprep.subr.mxu0 0.0
        %463 = vmatpush1.msra.mxu0 0.0
        %464 = vmatprep.subr.mxu0 0.0
        %465 = vmatpush1.msra.mxu0 0.0
        %466 = vmatprep.subr.mxu0 0.0
        %467 = vmatpush1.msra.mxu0 0.0
        %468 = vmatprep.subr.mxu0 0.0
        %469 = vmatpush1.msra.mxu0 0.0
        %470 = vmatprep.subr.mxu0 0.0
        %471 = vmatpush1.msra.mxu0 0.0
        %472 = vmatprep.subr.mxu0 0.0
        %473 = vmatpush1.msra.mxu0 0.0
        %474 = vmatprep.subr.mxu0 0.0
        %475 = vmatpush1.msra.mxu0 0.0
        %476 = vmatprep.subr.mxu0 0.0
        %477 = vmatpush1.msra.mxu0 0.0
        %478 = vmatprep.subr.mxu0 0.0
        %479 = vmatpush1.msra.mxu0 0.0
        %480 = vmatprep.subr.mxu0 0.0
        %481 = vmatpush1.msra.mxu0 0.0
        %482 = vmatprep.subr.mxu0 0.0
        %483 = vmatpush1.msra.mxu0 0.0
        %484 = vmatprep.subr.mxu0 0.0
        %485 = vmatpush1.msra.mxu0 0.0
        %486 = vmatprep.subr.mxu0 0.0
        %487 = vmatpush1.msra.mxu0 0.0
        %488 = vmatprep.subr.mxu0 0.0
        %489 = vmatpush1.msra.mxu0 0.0
        %490 = vmatprep.subr.mxu0 0.0
        %491 = vmatpush1.msra.mxu0 0.0
        %492 = vmatprep.subr.mxu0 0.0
        %493 = vmatpush1.msra.mxu0 0.0
        %494 = vmatprep.subr.mxu0 0.0
        %495 = vmatpush1.msra.mxu0 0.0
        %496 = vmatprep.subr.mxu0 0.0
        %497 = vmatpush1.msra.mxu0 0.0
        %498 = vmatprep.subr.mxu0 0.0
        %499 = vmatpush1.msra.mxu0 0.0
        %500 = vmatprep.subr.mxu0 0.0
        %501 = vmatpush1.msra.mxu0 0.0
        %502 = vmatprep.subr.mxu0 0.0
        %503 = vmatpush1.msra.mxu0 0.0
        %504 = vmatprep.subr.mxu0 0.0
        %505 = vmatpush1.msra.mxu0 0.0
        %506 = vmatprep.subr.mxu0 0.0
        %507 = vmatpush1.msra.mxu0 0.0
        %508 = vmatprep.subr.mxu0 0.0
        %509 = vmatpush1.msra.mxu0 0.0
        %510 = vmatprep.subr.mxu0 0.0
        %511 = vmatpush1.msra.mxu0 0.0
        %512 = vmatprep.subr.mxu0 0.0
        %513 = vmatpush1.msra.mxu0 0.0
        %514 = vmatprep.subr.mxu0 0.0
        %515 = vmatpush1.msra.mxu0 0.0
        %516 = vmatprep.mubr.f32.mxu0 0.0
        %517 = vmatmul.mubr.f32.gmra.mrb[0].mxu0 %v450
        %v518 = vpop.f32.mrb[0].mxu0
        %v519 = vadd.f32 %v446, %v518
        %v520 = vpop.f32.mrb[0].mxu0
        %521 = vdwg.mxu0
        %v522 = vld [vmem:[%s3] sm:$0xff]
        %v523 = vld [vmem:[%s3 + $0x8] sm:$0xff]
        %v524 = vld [vmem:[%s3 + $0x10] sm:$0xff]
        %v525 = vld [vmem:[%s3 + $0x18] sm:$0xff]
        %527 = vrot.lane.b32.xlu0 %v519, 96
        %v528 = vpop.permute.xlu0 %527
        %vm529 = vcmask 64512
        %v530 = vsel %vm529, %v519, 0
        %v532 = vsel %vm529, %v528, 0
        %534 = vmatprep.subr.mxu0 0.0
        %535 = vmatpush1.xpose.msra.mxu0 %v532
        %536 = vmatprep.subr.mxu0 0.0
        %537 = vmatpush1.xpose.msra.mxu0 0.0
        %538 = vmatprep.subr.mxu0 0.0
        %539 = vmatpush1.xpose.msra.mxu0 0.0
        %540 = vmatprep.subr.mxu0 0.0
        %541 = vmatpush1.xpose.msra.mxu0 0.0
        %542 = vmatprep.subr.mxu0 0.0
        %543 = vmatpush1.xpose.msra.mxu0 0.0
        %544 = vmatprep.subr.mxu0 0.0
        %545 = vmatpush1.xpose.msra.mxu0 0.0
        %546 = vmatprep.subr.mxu0 0.0
        %547 = vmatpush1.xpose.msra.mxu0 0.0
        %548 = vmatprep.subr.mxu0 0.0
        %549 = vmatpush1.xpose.msra.mxu0 0.0
        %550 = vmatprep.subr.mxu0 0.0
        %551 = vmatpush1.xpose.msra.mxu0 0.0
        %552 = vmatprep.subr.mxu0 0.0
        %553 = vmatpush1.xpose.msra.mxu0 0.0
        %554 = vmatprep.subr.mxu0 0.0
        %555 = vmatpush1.xpose.msra.mxu0 0.0
        %556 = vmatprep.subr.mxu0 0.0
        %557 = vmatpush1.xpose.msra.mxu0 0.0
        %558 = vmatprep.subr.mxu0 0.0
        %559 = vmatpush1.xpose.msra.mxu0 0.0
        %560 = vmatprep.subr.mxu0 0.0
        %561 = vmatpush1.xpose.msra.mxu0 0.0
        %562 = vmatprep.subr.mxu0 0.0
        %563 = vmatpush1.xpose.msra.mxu0 0.0
        %564 = vmatprep.subr.mxu0 0.0
        %565 = vmatpush1.xpose.msra.mxu0 0.0
        %566 = vmatprep.subr.mxu0 0.0
        %567 = vmatpush1.xpose.msra.mxu0 0.0
        %568 = vmatprep.subr.mxu0 0.0
        %569 = vmatpush1.xpose.msra.mxu0 0.0
        %570 = vmatprep.subr.mxu0 0.0
        %571 = vmatpush1.xpose.msra.mxu0 0.0
        %572 = vmatprep.subr.mxu0 0.0
        %573 = vmatpush1.xpose.msra.mxu0 0.0
        %574 = vmatprep.subr.mxu0 0.0
        %575 = vmatpush1.xpose.msra.mxu0 0.0
        %576 = vmatprep.subr.mxu0 0.0
        %577 = vmatpush1.xpose.msra.mxu0 0.0
        %578 = vmatprep.subr.mxu0 0.0
        %579 = vmatpush1.xpose.msra.mxu0 0.0
        %580 = vmatprep.subr.mxu0 0.0
        %581 = vmatpush1.xpose.msra.mxu0 0.0
        %582 = vmatprep.subr.mxu0 0.0
        %583 = vmatpush1.xpose.msra.mxu0 0.0
        %584 = vmatprep.subr.mxu0 0.0
        %585 = vmatpush1.xpose.msra.mxu0 0.0
        %586 = vmatprep.subr.mxu0 0.0
        %587 = vmatpush1.xpose.msra.mxu0 0.0
        %588 = vmatprep.subr.mxu0 0.0
        %589 = vmatpush1.xpose.msra.mxu0 0.0
        %590 = vmatprep.subr.mxu0 0.0
        %591 = vmatpush1.xpose.msra.mxu0 0.0
        %592 = vmatprep.subr.mxu0 0.0
        %593 = vmatpush1.xpose.msra.mxu0 0.0
        %594 = vmatprep.subr.mxu0 0.0
        %595 = vmatpush1.xpose.msra.mxu0 0.0
        %596 = vmatprep.subr.mxu0 0.0
        %597 = vmatpush1.xpose.msra.mxu0 0.0
        %598 = vmatprep.mubr.f32.mxu0 0.0
        %599 = vmatmul.mubr.f32.gmra.mrb[0].mxu0 %v530
        %v600 = vpop.f32.mrb[0].mxu0
        %v601 = vadd.f32 0.0, %v600
        %v602 = vpop.f32.mrb[0].mxu0
        %603 = vdwg.mxu0
        %v604 = vsel %vm529, %v601, -inf
        %605 = vmax.xlane.f32.xlu0 %v604
        %v606 = vpop.xlane.xlu0 %605
        %v607 = vsub.f32 %v601, %v606
        %v608 = vmul.f32 %v607, 1.442695
        %v609 = vpow.pop %v608
        %v610 = vsel %vm529, %v609, 0.0
        %611 = vadd.xlane.f32.xlu0 %v610
        %v612 = vpop.xlane.xlu0 %611
        %v613 = vrcp.pop %v612
        %v614 = vmul.f32 %v609, %v613
        %615 = vrot.lane.b32.xlu0 %v519, 64
        %v616 = vpop.permute.xlu0 %615
        %v617 = vsel %vm529, %v616, 0
        %619 = vmatprep.subr.mxu0 0.0
        %620 = vmatpush1.msra.mxu0 %v522
        %621 = vmatprep.subr.mxu0 0.0
        %622 = vmatpush1.msra.mxu0 0.0
        %623 = vmatprep.subr.mxu0 0.0
        %624 = vmatpush1.msra.mxu0 0.0
        %625 = vmatprep.subr.mxu0 0.0
        %626 = vmatpush1.msra.mxu0 0.0
        %627 = vmatprep.subr.mxu0 0.0
        %628 = vmatpush1.msra.mxu0 0.0
        %629 = vmatprep.subr.mxu0 0.0
        %630 = vmatpush1.msra.mxu0 0.0
        %631 = vmatprep.subr.mxu0 0.0
        %632 = vmatpush1.msra.mxu0 0.0
        %633 = vmatprep.subr.mxu0 0.0
        %634 = vmatpush1.msra.mxu0 0.0
        %635 = vmatprep.subr.mxu0 0.0
        %636 = vmatpush1.msra.mxu0 0.0
        %637 = vmatprep.subr.mxu0 0.0
        %638 = vmatpush1.msra.mxu0 0.0
        %639 = vmatprep.subr.mxu0 0.0
        %640 = vmatpush1.msra.mxu0 0.0
        %641 = vmatprep.subr.mxu0 0.0
        %642 = vmatpush1.msra.mxu0 0.0
        %643 = vmatprep.subr.mxu0 0.0
        %644 = vmatpush1.msra.mxu0 0.0
        %645 = vmatprep.subr.mxu0 0.0
        %646 = vmatpush1.msra.mxu0 0.0
        %647 = vmatprep.subr.mxu0 0.0
        %648 = vmatpush1.msra.mxu0 0.0
        %649 = vmatprep.subr.mxu0 0.0
        %650 = vmatpush1.msra.mxu0 0.0
        %651 = vmatprep.subr.mxu0 0.0
        %652 = vmatpush1.msra.mxu0 0.0
        %653 = vmatprep.subr.mxu0 0.0
        %654 = vmatpush1.msra.mxu0 0.0
        %655 = vmatprep.subr.mxu0 0.0
        %656 = vmatpush1.msra.mxu0 0.0
        %657 = vmatprep.subr.mxu0 0.0
        %658 = vmatpush1.msra.mxu0 0.0
        %659 = vmatprep.subr.mxu0 0.0
        %660 = vmatpush1.msra.mxu0 0.0
        %661 = vmatprep.subr.mxu0 0.0
        %662 = vmatpush1.msra.mxu0 0.0
        %663 = vmatprep.subr.mxu0 0.0
        %664 = vmatpush1.msra.mxu0 0.0
        %665 = vmatprep.subr.mxu0 0.0
        %666 = vmatpush1.msra.mxu0 0.0
        %667 = vmatprep.subr.mxu0 0.0
        %668 = vmatpush1.msra.mxu0 0.0
        %669 = vmatprep.subr.mxu0 0.0
        %670 = vmatpush1.msra.mxu0 0.0
        %671 = vmatprep.subr.mxu0 0.0
        %672 = vmatpush1.msra.mxu0 0.0
        %673 = vmatprep.subr.mxu0 0.0
        %674 = vmatpush1.msra.mxu0 0.0
        %675 = vmatprep.subr.mxu0 0.0
        %676 = vmatpush1.msra.mxu0 0.0
        %677 = vmatprep.subr.mxu0 0.0
        %678 = vmatpush1.msra.mxu0 0.0
        %679 = vmatprep.subr.mxu0 0.0
        %680 = vmatpush1.msra.mxu0 0.0
        %681 = vmatprep.subr.mxu0 0.0
        %682 = vmatpush1.msra.mxu0 0.0
        %683 = vmatprep.mubr.f32.mxu0 0.0
        %684 = vmatmul.mubr.f32.gmra.mrb[0].mxu0 %v617
        %v685 = vpop.f32.mrb[0].mxu0
        %v686 = vadd.f32 0.0, %v685
        %v687 = vpop.f32.mrb[0].mxu0
        %688 = vdwg.mxu0
        %689 = vrot.lane.b32.xlu0 %v519, 120
        %v690 = vpop.permute.xlu0 %689
        %691 = vrot.lane.b32.xlu0 %v519, 88
        %v692 = vpop.permute.xlu0 %691
        %v693 = vsel %vm529, %v690, 0
        %v695 = vsel %vm529, %v692, 0
        %697 = vmatprep.subr.mxu0 0.0
        %698 = vmatpush1.xpose.msra.mxu0 %v695
        %699 = vmatprep.subr.mxu0 0.0
        %700 = vmatpush1.xpose.msra.mxu0 0.0
        %701 = vmatprep.subr.mxu0 0.0
        %702 = vmatpush1.xpose.msra.mxu0 0.0
        %703 = vmatprep.subr.mxu0 0.0
        %704 = vmatpush1.xpose.msra.mxu0 0.0
        %705 = vmatprep.subr.mxu0 0.0
        %706 = vmatpush1.xpose.msra.mxu0 0.0
        %707 = vmatprep.subr.mxu0 0.0
        %708 = vmatpush1.xpose.msra.mxu0 0.0
        %709 = vmatprep.subr.mxu0 0.0
        %710 = vmatpush1.xpose.msra.mxu0 0.0
        %711 = vmatprep.subr.mxu0 0.0
        %712 = vmatpush1.xpose.msra.mxu0 0.0
        %713 = vmatprep.subr.mxu0 0.0
        %714 = vmatpush1.xpose.msra.mxu0 0.0
        %715 = vmatprep.subr.mxu0 0.0
        %716 = vmatpush1.xpose.msra.mxu0 0.0
        %717 = vmatprep.subr.mxu0 0.0
        %718 = vmatpush1.xpose.msra.mxu0 0.0
        %719 = vmatprep.subr.mxu0 0.0
        %720 = vmatpush1.xpose.msra.mxu0 0.0
        %721 = vmatprep.subr.mxu0 0.0
        %722 = vmatpush1.xpose.msra.mxu0 0.0
        %723 = vmatprep.subr.mxu0 0.0
        %724 = vmatpush1.xpose.msra.mxu0 0.0
        %725 = vmatprep.subr.mxu0 0.0
        %726 = vmatpush1.xpose.msra.mxu0 0.0
        %727 = vmatprep.subr.mxu0 0.0
        %728 = vmatpush1.xpose.msra.mxu0 0.0
        %729 = vmatprep.subr.mxu0 0.0
        %730 = vmatpush1.xpose.msra.mxu0 0.0
        %731 = vmatprep.subr.mxu0 0.0
        %732 = vmatpush1.xpose.msra.mxu0 0.0
        %733 = vmatprep.subr.mxu0 0.0
        %734 = vmatpush1.xpose.msra.mxu0 0.0
        %735 = vmatprep.subr.mxu0 0.0
        %736 = vmatpush1.xpose.msra.mxu0 0.0
        %737 = vmatprep.subr.mxu0 0.0
        %738 = vmatpush1.xpose.msra.mxu0 0.0
        %739 = vmatprep.subr.mxu0 0.0
        %740 = vmatpush1.xpose.msra.mxu0 0.0
        %741 = vmatprep.subr.mxu0 0.0
        %742 = vmatpush1.xpose.msra.mxu0 0.0
        %743 = vmatprep.subr.mxu0 0.0
        %744 = vmatpush1.xpose.msra.mxu0 0.0
        %745 = vmatprep.subr.mxu0 0.0
        %746 = vmatpush1.xpose.msra.mxu0 0.0
        %747 = vmatprep.subr.mxu0 0.0
        %748 = vmatpush1.xpose.msra.mxu0 0.0
        %749 = vmatprep.subr.mxu0 0.0
        %750 = vmatpush1.xpose.msra.mxu0 0.0
        %751 = vmatprep.subr.mxu0 0.0
        %752 = vmatpush1.xpose.msra.mxu0 0.0
        %753 = vmatprep.subr.mxu0 0.0
        %754 = vmatpush1.xpose.msra.mxu0 0.0
        %755 = vmatprep.subr.mxu0 0.0
        %756 = vmatpush1.xpose.msra.mxu0 0.0
        %757 = vmatprep.subr.mxu0 0.0
        %758 = vmatpush1.xpose.msra.mxu0 0.0
        %759 = vmatprep.subr.mxu0 0.0
        %760 = vmatpush1.xpose.msra.mxu0 0.0
        %761 = vmatprep.mubr.f32.mxu0 0.0
        %762 = vmatmul.mubr.f32.gmra.mrb[0].mxu0 %v693
        %v763 = vpop.f32.mrb[0].mxu0
        %v764 = vadd.f32 0.0, %v763
        %v765 = vpop.f32.mrb[0].mxu0
        %766 = vdwg.mxu0
        %v767 = vsel %vm529, %v764, -inf
        %768 = vmax.xlane.f32.xlu0 %v767
        %v769 = vpop.xlane.xlu0 %768
        %v770 = vsub.f32 %v764, %v769
        %v771 = vmul.f32 %v770, 1.442695
        %v772 = vpow.pop %v771
        %v773 = vsel %vm529, %v772, 0.0
        %774 = vadd.xlane.f32.xlu0 %v773
        %v775 = vpop.xlane.xlu0 %774
        %v776 = vrcp.pop %v775
        %v777 = vmul.f32 %v772, %v776
        %778 = vrot.lane.b32.xlu0 %v519, 56
        %v779 = vpop.permute.xlu0 %778
        %v780 = vsel %vm529, %v779, 0
        %782 = vmatprep.subr.mxu0 0.0
        %783 = vmatpush1.msra.mxu0 %v523
        %784 = vmatprep.subr.mxu0 0.0
        %785 = vmatpush1.msra.mxu0 0.0
        %786 = vmatprep.subr.mxu0 0.0
        %787 = vmatpush1.msra.mxu0 0.0
        %788 = vmatprep.subr.mxu0 0.0
        %789 = vmatpush1.msra.mxu0 0.0
        %790 = vmatprep.subr.mxu0 0.0
        %791 = vmatpush1.msra.mxu0 0.0
        %792 = vmatprep.subr.mxu0 0.0
        %793 = vmatpush1.msra.mxu0 0.0
        %794 = vmatprep.subr.mxu0 0.0
        %795 = vmatpush1.msra.mxu0 0.0
        %796 = vmatprep.subr.mxu0 0.0
        %797 = vmatpush1.msra.mxu0 0.0
        %798 = vmatprep.subr.mxu0 0.0
        %799 = vmatpush1.msra.mxu0 0.0
        %800 = vmatprep.subr.mxu0 0.0
        %801 = vmatpush1.msra.mxu0 0.0
        %802 = vmatprep.subr.mxu0 0.0
        %803 = vmatpush1.msra.mxu0 0.0
        %804 = vmatprep.subr.mxu0 0.0
        %805 = vmatpush1.msra.mxu0 0.0
        %806 = vmatprep.subr.mxu0 0.0
        %807 = vmatpush1.msra.mxu0 0.0
        %808 = vmatprep.subr.mxu0 0.0
        %809 = vmatpush1.msra.mxu0 0.0
        %810 = vmatprep.subr.mxu0 0.0
        %811 = vmatpush1.msra.mxu0 0.0
        %812 = vmatprep.subr.mxu0 0.0
        %813 = vmatpush1.msra.mxu0 0.0
        %814 = vmatprep.subr.mxu0 0.0
        %815 = vmatpush1.msra.mxu0 0.0
        %816 = vmatprep.subr.mxu0 0.0
        %817 = vmatpush1.msra.mxu0 0.0
        %818 = vmatprep.subr.mxu0 0.0
        %819 = vmatpush1.msra.mxu0 0.0
        %820 = vmatprep.subr.mxu0 0.0
        %821 = vmatpush1.msra.mxu0 0.0
        %822 = vmatprep.subr.mxu0 0.0
        %823 = vmatpush1.msra.mxu0 0.0
        %824 = vmatprep.subr.mxu0 0.0
        %825 = vmatpush1.msra.mxu0 0.0
        %826 = vmatprep.subr.mxu0 0.0
        %827 = vmatpush1.msra.mxu0 0.0
        %828 = vmatprep.subr.mxu0 0.0
        %829 = vmatpush1.msra.mxu0 0.0
        %830 = vmatprep.subr.mxu0 0.0
        %831 = vmatpush1.msra.mxu0 0.0
        %832 = vmatprep.subr.mxu0 0.0
        %833 = vmatpush1.msra.mxu0 0.0
        %834 = vmatprep.subr.mxu0 0.0
        %835 = vmatpush1.msra.mxu0 0.0
        %836 = vmatprep.subr.mxu0 0.0
        %837 = vmatpush1.msra.mxu0 0.0
        %838 = vmatprep.subr.mxu0 0.0
        %839 = vmatpush1.msra.mxu0 0.0
        %840 = vmatprep.subr.mxu0 0.0
        %841 = vmatpush1.msra.mxu0 0.0
        %842 = vmatprep.subr.mxu0 0.0
        %843 = vmatpush1.msra.mxu0 0.0
        %844 = vmatprep.subr.mxu0 0.0
        %845 = vmatpush1.msra.mxu0 0.0
        %846 = vmatprep.mubr.f32.mxu0 0.0
        %847 = vmatmul.mubr.f32.gmra.mrb[0].mxu0 %v780
        %v848 = vpop.f32.mrb[0].mxu0
        %v849 = vadd.f32 0.0, %v848
        %v850 = vpop.f32.mrb[0].mxu0
        %851 = vdwg.mxu0
        %v853 = vsel %vm529, %v777, 0
        %855 = vmatprep.subr.mxu0 0.0
        %856 = vmatpush1.msra.mxu0 %v849
        %857 = vmatprep.subr.mxu0 0.0
        %858 = vmatpush1.msra.mxu0 0.0
        %859 = vmatprep.subr.mxu0 0.0
        %860 = vmatpush1.msra.mxu0 0.0
        %861 = vmatprep.subr.mxu0 0.0
        %862 = vmatpush1.msra.mxu0 0.0
        %863 = vmatprep.subr.mxu0 0.0
        %864 = vmatpush1.msra.mxu0 0.0
        %865 = vmatprep.subr.mxu0 0.0
        %866 = vmatpush1.msra.mxu0 0.0
        %867 = vmatprep.subr.mxu0 0.0
        %868 = vmatpush1.msra.mxu0 0.0
        %869 = vmatprep.subr.mxu0 0.0
        %870 = vmatpush1.msra.mxu0 0.0
        %871 = vmatprep.subr.mxu0 0.0
        %872 = vmatpush1.msra.mxu0 0.0
        %873 = vmatprep.subr.mxu0 0.0
        %874 = vmatpush1.msra.mxu0 0.0
        %875 = vmatprep.subr.mxu0 0.0
        %876 = vmatpush1.msra.mxu0 0.0
        %877 = vmatprep.subr.mxu0 0.0
        %878 = vmatpush1.msra.mxu0 0.0
        %879 = vmatprep.subr.mxu0 0.0
        %880 = vmatpush1.msra.mxu0 0.0
        %881 = vmatprep.subr.mxu0 0.0
        %882 = vmatpush1.msra.mxu0 0.0
        %883 = vmatprep.subr.mxu0 0.0
        %884 = vmatpush1.msra.mxu0 0.0
        %885 = vmatprep.subr.mxu0 0.0
        %886 = vmatpush1.msra.mxu0 0.0
        %887 = vmatprep.subr.mxu0 0.0
        %888 = vmatpush1.msra.mxu0 0.0
        %889 = vmatprep.subr.mxu0 0.0
        %890 = vmatpush1.msra.mxu0 0.0
        %891 = vmatprep.subr.mxu0 0.0
        %892 = vmatpush1.msra.mxu0 0.0
        %893 = vmatprep.subr.mxu0 0.0
        %894 = vmatpush1.msra.mxu0 0.0
        %895 = vmatprep.subr.mxu0 0.0
        %896 = vmatpush1.msra.mxu0 0.0
        %897 = vmatprep.subr.mxu0 0.0
        %898 = vmatpush1.msra.mxu0 0.0
        %899 = vmatprep.subr.mxu0 0.0
        %900 = vmatpush1.msra.mxu0 0.0
        %901 = vmatprep.subr.mxu0 0.0
        %902 = vmatpush1.msra.mxu0 0.0
        %903 = vmatprep.subr.mxu0 0.0
        %904 = vmatpush1.msra.mxu0 0.0
        %905 = vmatprep.subr.mxu0 0.0
        %906 = vmatpush1.msra.mxu0 0.0
        %907 = vmatprep.subr.mxu0 0.0
        %908 = vmatpush1.msra.mxu0 0.0
        %909 = vmatprep.subr.mxu0 0.0
        %910 = vmatpush1.msra.mxu0 0.0
        %911 = vmatprep.subr.mxu0 0.0
        %912 = vmatpush1.msra.mxu0 0.0
        %913 = vmatprep.subr.mxu0 0.0
        %914 = vmatpush1.msra.mxu0 0.0
        %915 = vmatprep.subr.mxu0 0.0
        %916 = vmatpush1.msra.mxu0 0.0
        %917 = vmatprep.subr.mxu0 0.0
        %918 = vmatpush1.msra.mxu0 0.0
        %919 = vmatprep.mubr.f32.mxu0 0.0
        %920 = vmatmul.mubr.f32.gmra.mrb[0].mxu0 %v853
        %v921 = vpop.f32.mrb[0].mxu0
        %v922 = vadd.f32 0.0, %v921
        %v923 = vpop.f32.mrb[0].mxu0
        %924 = vdwg.mxu0
        %v926 = vsel %vm529, %v614, 0
        %928 = vmatprep.subr.mxu0 0.0
        %929 = vmatpush1.msra.mxu0 %v686
        %930 = vmatprep.subr.mxu0 0.0
        %931 = vmatpush1.msra.mxu0 0.0
        %932 = vmatprep.subr.mxu0 0.0
        %933 = vmatpush1.msra.mxu0 0.0
        %934 = vmatprep.subr.mxu0 0.0
        %935 = vmatpush1.msra.mxu0 0.0
        %936 = vmatprep.subr.mxu0 0.0
        %937 = vmatpush1.msra.mxu0 0.0
        %938 = vmatprep.subr.mxu0 0.0
        %939 = vmatpush1.msra.mxu0 0.0
        %940 = vmatprep.subr.mxu0 0.0
        %941 = vmatpush1.msra.mxu0 0.0
        %942 = vmatprep.subr.mxu0 0.0
        %943 = vmatpush1.msra.mxu0 0.0
        %944 = vmatprep.subr.mxu0 0.0
        %945 = vmatpush1.msra.mxu0 0.0
        %946 = vmatprep.subr.mxu0 0.0
        %947 = vmatpush1.msra.mxu0 0.0
        %948 = vmatprep.subr.mxu0 0.0
        %949 = vmatpush1.msra.mxu0 0.0
        %950 = vmatprep.subr.mxu0 0.0
        %951 = vmatpush1.msra.mxu0 0.0
        %952 = vmatprep.subr.mxu0 0.0
        %953 = vmatpush1.msra.mxu0 0.0
        %954 = vmatprep.subr.mxu0 0.0
        %955 = vmatpush1.msra.mxu0 0.0
        %956 = vmatprep.subr.mxu0 0.0
        %957 = vmatpush1.msra.mxu0 0.0
        %958 = vmatprep.subr.mxu0 0.0
        %959 = vmatpush1.msra.mxu0 0.0
        %960 = vmatprep.subr.mxu0 0.0
        %961 = vmatpush1.msra.mxu0 0.0
        %962 = vmatprep.subr.mxu0 0.0
        %963 = vmatpush1.msra.mxu0 0.0
        %964 = vmatprep.subr.mxu0 0.0
        %965 = vmatpush1.msra.mxu0 0.0
        %966 = vmatprep.subr.mxu0 0.0
        %967 = vmatpush1.msra.mxu0 0.0
        %968 = vmatprep.subr.mxu0 0.0
        %969 = vmatpush1.msra.mxu0 0.0
        %970 = vmatprep.subr.mxu0 0.0
        %971 = vmatpush1.msra.mxu0 0.0
        %972 = vmatprep.subr.mxu0 0.0
        %973 = vmatpush1.msra.mxu0 0.0
        %974 = vmatprep.subr.mxu0 0.0
        %975 = vmatpush1.msra.mxu0 0.0
        %976 = vmatprep.subr.mxu0 0.0
        %977 = vmatpush1.msra.mxu0 0.0
        %978 = vmatprep.subr.mxu0 0.0
        %979 = vmatpush1.msra.mxu0 0.0
        %980 = vmatprep.subr.mxu0 0.0
        %981 = vmatpush1.msra.mxu0 0.0
        %982 = vmatprep.subr.mxu0 0.0
        %983 = vmatpush1.msra.mxu0 0.0
        %984 = vmatprep.subr.mxu0 0.0
        %985 = vmatpush1.msra.mxu0 0.0
        %986 = vmatprep.subr.mxu0 0.0
        %987 = vmatpush1.msra.mxu0 0.0
        %988 = vmatprep.subr.mxu0 0.0
        %989 = vmatpush1.msra.mxu0 0.0
        %990 = vmatprep.subr.mxu0 0.0
        %991 = vmatpush1.msra.mxu0 0.0
        %992 = vmatprep.mubr.f32.mxu0 0.0
        %993 = vmatmul.mubr.f32.gmra.mrb[0].mxu0 %v926
        %v994 = vpop.f32.mrb[0].mxu0
        %v995 = vadd.f32 %v922, %v994
        %v996 = vpop.f32.mrb[0].mxu0
        %997 = vdwg.mxu0
        %998 = vrot.lane.b32.xlu0 %v519, 112
        %v999 = vpop.permute.xlu0 %998
        %1000 = vrot.lane.b32.xlu0 %v519, 80
        %v1001 = vpop.permute.xlu0 %1000
        %v1002 = vsel %vm529, %v999, 0
        %v1004 = vsel %vm529, %v1001, 0
        %1006 = vmatprep.subr.mxu0 0.0
        %1007 = vmatpush1.xpose.msra.mxu0 %v1004
        %1008 = vmatprep.subr.mxu0 0.0
        %1009 = vmatpush1.xpose.msra.mxu0 0.0
        %1010 = vmatprep.subr.mxu0 0.0
        %1011 = vmatpush1.xpose.msra.mxu0 0.0
        %1012 = vmatprep.subr.mxu0 0.0
        %1013 = vmatpush1.xpose.msra.mxu0 0.0
        %1014 = vmatprep.subr.mxu0 0.0
        %1015 = vmatpush1.xpose.msra.mxu0 0.0
        %1016 = vmatprep.subr.mxu0 0.0
        %1017 = vmatpush1.xpose.msra.mxu0 0.0
        %1018 = vmatprep.subr.mxu0 0.0
        %1019 = vmatpush1.xpose.msra.mxu0 0.0
        %1020 = vmatprep.subr.mxu0 0.0
        %1021 = vmatpush1.xpose.msra.mxu0 0.0
        %1022 = vmatprep.subr.mxu0 0.0
        %1023 = vmatpush1.xpose.msra.mxu0 0.0
        %1024 = vmatprep.subr.mxu0 0.0
        %1025 = vmatpush1.xpose.msra.mxu0 0.0
        %1026 = vmatprep.subr.mxu0 0.0
        %1027 = vmatpush1.xpose.msra.mxu0 0.0
        %1028 = vmatprep.subr.mxu0 0.0
        %1029 = vmatpush1.xpose.msra.mxu0 0.0
        %1030 = vmatprep.subr.mxu0 0.0
        %1031 = vmatpush1.xpose.msra.mxu0 0.0
        %1032 = vmatprep.subr.mxu0 0.0
        %1033 = vmatpush1.xpose.msra.mxu0 0.0
        %1034 = vmatprep.subr.mxu0 0.0
        %1035 = vmatpush1.xpose.msra.mxu0 0.0
        %1036 = vmatprep.subr.mxu0 0.0
        %1037 = vmatpush1.xpose.msra.mxu0 0.0
        %1038 = vmatprep.subr.mxu0 0.0
        %1039 = vmatpush1.xpose.msra.mxu0 0.0
        %1040 = vmatprep.subr.mxu0 0.0
        %1041 = vmatpush1.xpose.msra.mxu0 0.0
        %1042 = vmatprep.subr.mxu0 0.0
        %1043 = vmatpush1.xpose.msra.mxu0 0.0
        %1044 = vmatprep.subr.mxu0 0.0
        %1045 = vmatpush1.xpose.msra.mxu0 0.0
        %1046 = vmatprep.subr.mxu0 0.0
        %1047 = vmatpush1.xpose.msra.mxu0 0.0
        %1048 = vmatprep.subr.mxu0 0.0
        %1049 = vmatpush1.xpose.msra.mxu0 0.0
        %1050 = vmatprep.subr.mxu0 0.0
        %1051 = vmatpush1.xpose.msra.mxu0 0.0
        %1052 = vmatprep.subr.mxu0 0.0
        %1053 = vmatpush1.xpose.msra.mxu0 0.0
        %1054 = vmatprep.subr.mxu0 0.0
        %1055 = vmatpush1.xpose.msra.mxu0 0.0
        %1056 = vmatprep.subr.mxu0 0.0
        %1057 = vmatpush1.xpose.msra.mxu0 0.0
        %1058 = vmatprep.subr.mxu0 0.0
        %1059 = vmatpush1.xpose.msra.mxu0 0.0
        %1060 = vmatprep.subr.mxu0 0.0
        %1061 = vmatpush1.xpose.msra.mxu0 0.0
        %1062 = vmatprep.subr.mxu0 0.0
        %1063 = vmatpush1.xpose.msra.mxu0 0.0
        %1064 = vmatprep.subr.mxu0 0.0
        %1065 = vmatpush1.xpose.msra.mxu0 0.0
        %1066 = vmatprep.subr.mxu0 0.0
        %1067 = vmatpush1.xpose.msra.mxu0 0.0
        %1068 = vmatprep.subr.mxu0 0.0
        %1069 = vmatpush1.xpose.msra.mxu0 0.0
        %1070 = vmatprep.mubr.f32.mxu0 0.0
        %1071 = vmatmul.mubr.f32.gmra.mrb[0].mxu0 %v1002
        %v1072 = vpop.f32.mrb[0].mxu0
        %v1073 = vadd.f32 0.0, %v1072
        %v1074 = vpop.f32.mrb[0].mxu0
        %1075 = vdwg.mxu0
        %v1076 = vsel %vm529, %v1073, -inf
        %1077 = vmax.xlane.f32.xlu0 %v1076
        %v1078 = vpop.xlane.xlu0 %1077
        %v1079 = vsub.f32 %v1073, %v1078
        %v1080 = vmul.f32 %v1079, 1.442695
        %v1081 = vpow.pop %v1080
        %v1082 = vsel %vm529, %v1081, 0.0
        %1083 = vadd.xlane.f32.xlu0 %v1082
        %v1084 = vpop.xlane.xlu0 %1083
        %v1085 = vrcp.pop %v1084
        %v1086 = vmul.f32 %v1081, %v1085
        %1087 = vrot.lane.b32.xlu0 %v519, 48
        %v1088 = vpop.permute.xlu0 %1087
        %v1089 = vsel %vm529, %v1088, 0
        %1091 = vmatprep.subr.mxu0 0.0
        %1092 = vmatpush1.msra.mxu0 %v524
        %1093 = vmatprep.subr.mxu0 0.0
        %1094 = vmatpush1.msra.mxu0 0.0
        %1095 = vmatprep.subr.mxu0 0.0
        %1096 = vmatpush1.msra.mxu0 0.0
        %1097 = vmatprep.subr.mxu0 0.0
        %1098 = vmatpush1.msra.mxu0 0.0
        %1099 = vmatprep.subr.mxu0 0.0
        %1100 = vmatpush1.msra.mxu0 0.0
        %1101 = vmatprep.subr.mxu0 0.0
        %1102 = vmatpush1.msra.mxu0 0.0
        %1103 = vmatprep.subr.mxu0 0.0
        %1104 = vmatpush1.msra.mxu0 0.0
        %1105 = vmatprep.subr.mxu0 0.0
        %1106 = vmatpush1.msra.mxu0 0.0
        %1107 = vmatprep.subr.mxu0 0.0
        %1108 = vmatpush1.msra.mxu0 0.0
        %1109 = vmatprep.subr.mxu0 0.0
        %1110 = vmatpush1.msra.mxu0 0.0
        %1111 = vmatprep.subr.mxu0 0.0
        %1112 = vmatpush1.msra.mxu0 0.0
        %1113 = vmatprep.subr.mxu0 0.0
        %1114 = vmatpush1.msra.mxu0 0.0
        %1115 = vmatprep.subr.mxu0 0.0
        %1116 = vmatpush1.msra.mxu0 0.0
        %1117 = vmatprep.subr.mxu0 0.0
        %1118 = vmatpush1.msra.mxu0 0.0
        %1119 = vmatprep.subr.mxu0 0.0
        %1120 = vmatpush1.msra.mxu0 0.0
        %1121 = vmatprep.subr.mxu0 0.0
        %1122 = vmatpush1.msra.mxu0 0.0
        %1123 = vmatprep.subr.mxu0 0.0
        %1124 = vmatpush1.msra.mxu0 0.0
        %1125 = vmatprep.subr.mxu0 0.0
        %1126 = vmatpush1.msra.mxu0 0.0
        %1127 = vmatprep.subr.mxu0 0.0
        %1128 = vmatpush1.msra.mxu0 0.0
        %1129 = vmatprep.subr.mxu0 0.0
        %1130 = vmatpush1.msra.mxu0 0.0
        %1131 = vmatprep.subr.mxu0 0.0
        %1132 = vmatpush1.msra.mxu0 0.0
        %1133 = vmatprep.subr.mxu0 0.0
        %1134 = vmatpush1.msra.mxu0 0.0
        %1135 = vmatprep.subr.mxu0 0.0
        %1136 = vmatpush1.msra.mxu0 0.0
        %1137 = vmatprep.subr.mxu0 0.0
        %1138 = vmatpush1.msra.mxu0 0.0
        %1139 = vmatprep.subr.mxu0 0.0
        %1140 = vmatpush1.msra.mxu0 0.0
        %1141 = vmatprep.subr.mxu0 0.0
        %1142 = vmatpush1.msra.mxu0 0.0
        %1143 = vmatprep.subr.mxu0 0.0
        %1144 = vmatpush1.msra.mxu0 0.0
        %1145 = vmatprep.subr.mxu0 0.0
        %1146 = vmatpush1.msra.mxu0 0.0
        %1147 = vmatprep.subr.mxu0 0.0
        %1148 = vmatpush1.msra.mxu0 0.0
        %1149 = vmatprep.subr.mxu0 0.0
        %1150 = vmatpush1.msra.mxu0 0.0
        %1151 = vmatprep.subr.mxu0 0.0
        %1152 = vmatpush1.msra.mxu0 0.0
        %1153 = vmatprep.subr.mxu0 0.0
        %1154 = vmatpush1.msra.mxu0 0.0
        %1155 = vmatprep.mubr.f32.mxu0 0.0
        %1156 = vmatmul.mubr.f32.gmra.mrb[0].mxu0 %v1089
        %v1157 = vpop.f32.mrb[0].mxu0
        %v1158 = vadd.f32 0.0, %v1157
        %v1159 = vpop.f32.mrb[0].mxu0
        %1160 = vdwg.mxu0
        %v1162 = vsel %vm529, %v1086, 0
        %1164 = vmatprep.subr.mxu0 0.0
        %1165 = vmatpush1.msra.mxu0 %v1158
        %1166 = vmatprep.subr.mxu0 0.0
        %1167 = vmatpush1.msra.mxu0 0.0
        %1168 = vmatprep.subr.mxu0 0.0
        %1169 = vmatpush1.msra.mxu0 0.0
        %1170 = vmatprep.subr.mxu0 0.0
        %1171 = vmatpush1.msra.mxu0 0.0
        %1172 = vmatprep.subr.mxu0 0.0
        %1173 = vmatpush1.msra.mxu0 0.0
        %1174 = vmatprep.subr.mxu0 0.0
        %1175 = vmatpush1.msra.mxu0 0.0
        %1176 = vmatprep.subr.mxu0 0.0
        %1177 = vmatpush1.msra.mxu0 0.0
        %1178 = vmatprep.subr.mxu0 0.0
        %1179 = vmatpush1.msra.mxu0 0.0
        %1180 = vmatprep.subr.mxu0 0.0
        %1181 = vmatpush1.msra.mxu0 0.0
        %1182 = vmatprep.subr.mxu0 0.0
        %1183 = vmatpush1.msra.mxu0 0.0
        %1184 = vmatprep.subr.mxu0 0.0
        %1185 = vmatpush1.msra.mxu0 0.0
        %1186 = vmatprep.subr.mxu0 0.0
        %1187 = vmatpush1.msra.mxu0 0.0
        %1188 = vmatprep.subr.mxu0 0.0
        %1189 = vmatpush1.msra.mxu0 0.0
        %1190 = vmatprep.subr.mxu0 0.0
        %1191 = vmatpush1.msra.mxu0 0.0
        %1192 = vmatprep.subr.mxu0 0.0
        %1193 = vmatpush1.msra.mxu0 0.0
        %1194 = vmatprep.subr.mxu0 0.0
        %1195 = vmatpush1.msra.mxu0 0.0
        %1196 = vmatprep.subr.mxu0 0.0
        %1197 = vmatpush1.msra.mxu0 0.0
        %1198 = vmatprep.subr.mxu0 0.0
        %1199 = vmatpush1.msra.mxu0 0.0
        %1200 = vmatprep.subr.mxu0 0.0
        %1201 = vmatpush1.msra.mxu0 0.0
        %1202 = vmatprep.subr.mxu0 0.0
        %1203 = vmatpush1.msra.mxu0 0.0
        %1204 = vmatprep.subr.mxu0 0.0
        %1205 = vmatpush1.msra.mxu0 0.0
        %1206 = vmatprep.subr.mxu0 0.0
        %1207 = vmatpush1.msra.mxu0 0.0
        %1208 = vmatprep.subr.mxu0 0.0
        %1209 = vmatpush1.msra.mxu0 0.0
        %1210 = vmatprep.subr.mxu0 0.0
        %1211 = vmatpush1.msra.mxu0 0.0
        %1212 = vmatprep.subr.mxu0 0.0
        %1213 = vmatpush1.msra.mxu0 0.0
        %1214 = vmatprep.subr.mxu0 0.0
        %1215 = vmatpush1.msra.mxu0 0.0
        %1216 = vmatprep.subr.mxu0 0.0
        %1217 = vmatpush1.msra.mxu0 0.0
        %1218 = vmatprep.subr.mxu0 0.0
        %1219 = vmatpush1.msra.mxu0 0.0
        %1220 = vmatprep.subr.mxu0 0.0
        %1221 = vmatpush1.msra.mxu0 0.0
        %1222 = vmatprep.subr.mxu0 0.0
        %1223 = vmatpush1.msra.mxu0 0.0
        %1224 = vmatprep.subr.mxu0 0.0
        %1225 = vmatpush1.msra.mxu0 0.0
        %1226 = vmatprep.subr.mxu0 0.0
        %1227 = vmatpush1.msra.mxu0 0.0
        %1228 = vmatprep.mubr.f32.mxu0 0.0
        %1229 = vmatmul.mubr.f32.gmra.mrb[0].mxu0 %v1162
        %v1230 = vpop.f32.mrb[0].mxu0
        %v1231 = vadd.f32 0.0, %v1230
        %v1232 = vpop.f32.mrb[0].mxu0
        %1233 = vdwg.mxu0
        %v1234 = vadd.f32 %v995, %v1231
        %1235 = vrot.lane.b32.xlu0 %v519, 104
        %v1236 = vpop.permute.xlu0 %1235
        %1237 = vrot.lane.b32.xlu0 %v519, 72
        %v1238 = vpop.permute.xlu0 %1237
        %v1239 = vsel %vm529, %v1236, 0
        %v1241 = vsel %vm529, %v1238, 0
        %1243 = vmatprep.subr.mxu0 0.0
        %1244 = vmatpush1.xpose.msra.mxu0 %v1241
        %1245 = vmatprep.subr.mxu0 0.0
        %1246 = vmatpush1.xpose.msra.mxu0 0.0
        %1247 = vmatprep.subr.mxu0 0.0
        %1248 = vmatpush1.xpose.msra.mxu0 0.0
        %1249 = vmatprep.subr.mxu0 0.0
        %1250 = vmatpush1.xpose.msra.mxu0 0.0
        %1251 = vmatprep.subr.mxu0 0.0
        %1252 = vmatpush1.xpose.msra.mxu0 0.0
        %1253 = vmatprep.subr.mxu0 0.0
        %1254 = vmatpush1.xpose.msra.mxu0 0.0
        %1255 = vmatprep.subr.mxu0 0.0
        %1256 = vmatpush1.xpose.msra.mxu0 0.0
        %1257 = vmatprep.subr.mxu0 0.0
        %1258 = vmatpush1.xpose.msra.mxu0 0.0
        %1259 = vmatprep.subr.mxu0 0.0
        %1260 = vmatpush1.xpose.msra.mxu0 0.0
        %1261 = vmatprep.subr.mxu0 0.0
        %1262 = vmatpush1.xpose.msra.mxu0 0.0
        %1263 = vmatprep.subr.mxu0 0.0
        %1264 = vmatpush1.xpose.msra.mxu0 0.0
        %1265 = vmatprep.subr.mxu0 0.0
        %1266 = vmatpush1.xpose.msra.mxu0 0.0
        %1267 = vmatprep.subr.mxu0 0.0
        %1268 = vmatpush1.xpose.msra.mxu0 0.0
        %1269 = vmatprep.subr.mxu0 0.0
        %1270 = vmatpush1.xpose.msra.mxu0 0.0
        %1271 = vmatprep.subr.mxu0 0.0
        %1272 = vmatpush1.xpose.msra.mxu0 0.0
        %1273 = vmatprep.subr.mxu0 0.0
        %1274 = vmatpush1.xpose.msra.mxu0 0.0
        %1275 = vmatprep.subr.mxu0 0.0
        %1276 = vmatpush1.xpose.msra.mxu0 0.0
        %1277 = vmatprep.subr.mxu0 0.0
        %1278 = vmatpush1.xpose.msra.mxu0 0.0
        %1279 = vmatprep.subr.mxu0 0.0
        %1280 = vmatpush1.xpose.msra.mxu0 0.0
        %1281 = vmatprep.subr.mxu0 0.0
        %1282 = vmatpush1.xpose.msra.mxu0 0.0
        %1283 = vmatprep.subr.mxu0 0.0
        %1284 = vmatpush1.xpose.msra.mxu0 0.0
        %1285 = vmatprep.subr.mxu0 0.0
        %1286 = vmatpush1.xpose.msra.mxu0 0.0
        %1287 = vmatprep.subr.mxu0 0.0
        %1288 = vmatpush1.xpose.msra.mxu0 0.0
        %1289 = vmatprep.subr.mxu0 0.0
        %1290 = vmatpush1.xpose.msra.mxu0 0.0
        %1291 = vmatprep.subr.mxu0 0.0
        %1292 = vmatpush1.xpose.msra.mxu0 0.0
        %1293 = vmatprep.subr.mxu0 0.0
        %1294 = vmatpush1.xpose.msra.mxu0 0.0
        %1295 = vmatprep.subr.mxu0 0.0
        %1296 = vmatpush1.xpose.msra.mxu0 0.0
        %1297 = vmatprep.subr.mxu0 0.0
        %1298 = vmatpush1.xpose.msra.mxu0 0.0
        %1299 = vmatprep.subr.mxu0 0.0
        %1300 = vmatpush1.xpose.msra.mxu0 0.0
        %1301 = vmatprep.subr.mxu0 0.0
        %1302 = vmatpush1.xpose.msra.mxu0 0.0
        %1303 = vmatprep.subr.mxu0 0.0
        %1304 = vmatpush1.xpose.msra.mxu0 0.0
        %1305 = vmatprep.subr.mxu0 0.0
        %1306 = vmatpush1.xpose.msra.mxu0 0.0
        %1307 = vmatprep.mubr.f32.mxu0 0.0
        %1308 = vmatmul.mubr.f32.gmra.mrb[0].mxu0 %v1239
        %v1309 = vpop.f32.mrb[0].mxu0
        %v1310 = vadd.f32 0.0, %v1309
        %v1311 = vpop.f32.mrb[0].mxu0
        %1312 = vdwg.mxu0
        %v1313 = vsel %vm529, %v1310, -inf
        %1314 = vmax.xlane.f32.xlu0 %v1313
        %v1315 = vpop.xlane.xlu0 %1314
        %v1316 = vsub.f32 %v1310, %v1315
        %v1317 = vmul.f32 %v1316, 1.442695
        %v1318 = vpow.pop %v1317
        %v1319 = vsel %vm529, %v1318, 0.0
        %1320 = vadd.xlane.f32.xlu0 %v1319
        %v1321 = vpop.xlane.xlu0 %1320
        %v1322 = vrcp.pop %v1321
        %v1323 = vmul.f32 %v1318, %v1322
        %1324 = vrot.lane.b32.xlu0 %v519, 40
        %v1325 = vpop.permute.xlu0 %1324
        %v1326 = vsel %vm529, %v1325, 0
        %1328 = vmatprep.subr.mxu0 0.0
        %1329 = vmatpush1.msra.mxu0 %v525
        %1330 = vmatprep.subr.mxu0 0.0
        %1331 = vmatpush1.msra.mxu0 0.0
        %1332 = vmatprep.subr.mxu0 0.0
        %1333 = vmatpush1.msra.mxu0 0.0
        %1334 = vmatprep.subr.mxu0 0.0
        %1335 = vmatpush1.msra.mxu0 0.0
        %1336 = vmatprep.subr.mxu0 0.0
        %1337 = vmatpush1.msra.mxu0 0.0
        %1338 = vmatprep.subr.mxu0 0.0
        %1339 = vmatpush1.msra.mxu0 0.0
        %1340 = vmatprep.subr.mxu0 0.0
        %1341 = vmatpush1.msra.mxu0 0.0
        %1342 = vmatprep.subr.mxu0 0.0
        %1343 = vmatpush1.msra.mxu0 0.0
        %1344 = vmatprep.subr.mxu0 0.0
        %1345 = vmatpush1.msra.mxu0 0.0
        %1346 = vmatprep.subr.mxu0 0.0
        %1347 = vmatpush1.msra.mxu0 0.0
        %1348 = vmatprep.subr.mxu0 0.0
        %1349 = vmatpush1.msra.mxu0 0.0
        %1350 = vmatprep.subr.mxu0 0.0
        %1351 = vmatpush1.msra.mxu0 0.0
        %1352 = vmatprep.subr.mxu0 0.0
        %1353 = vmatpush1.msra.mxu0 0.0
        %1354 = vmatprep.subr.mxu0 0.0
        %1355 = vmatpush1.msra.mxu0 0.0
        %1356 = vmatprep.subr.mxu0 0.0
        %1357 = vmatpush1.msra.mxu0 0.0
        %1358 = vmatprep.subr.mxu0 0.0
        %1359 = vmatpush1.msra.mxu0 0.0
        %1360 = vmatprep.subr.mxu0 0.0
        %1361 = vmatpush1.msra.mxu0 0.0
        %1362 = vmatprep.subr.mxu0 0.0
        %1363 = vmatpush1.msra.mxu0 0.0
        %1364 = vmatprep.subr.mxu0 0.0
        %1365 = vmatpush1.msra.mxu0 0.0
        %1366 = vmatprep.subr.mxu0 0.0
        %1367 = vmatpush1.msra.mxu0 0.0
        %1368 = vmatprep.subr.mxu0 0.0
        %1369 = vmatpush1.msra.mxu0 0.0
        %1370 = vmatprep.subr.mxu0 0.0
        %1371 = vmatpush1.msra.mxu0 0.0
        %1372 = vmatprep.subr.mxu0 0.0
        %1373 = vmatpush1.msra.mxu0 0.0
        %1374 = vmatprep.subr.mxu0 0.0
        %1375 = vmatpush1.msra.mxu0 0.0
        %1376 = vmatprep.subr.mxu0 0.0
        %1377 = vmatpush1.msra.mxu0 0.0
        %1378 = vmatprep.subr.mxu0 0.0
        %1379 = vmatpush1.msra.mxu0 0.0
        %1380 = vmatprep.subr.mxu0 0.0
        %1381 = vmatpush1.msra.mxu0 0.0
        %1382 = vmatprep.subr.mxu0 0.0
        %1383 = vmatpush1.msra.mxu0 0.0
        %1384 = vmatprep.subr.mxu0 0.0
        %1385 = vmatpush1.msra.mxu0 0.0
        %1386 = vmatprep.subr.mxu0 0.0
        %1387 = vmatpush1.msra.mxu0 0.0
        %1388 = vmatprep.subr.mxu0 0.0
        %1389 = vmatpush1.msra.mxu0 0.0
        %1390 = vmatprep.subr.mxu0 0.0
        %1391 = vmatpush1.msra.mxu0 0.0
        %1392 = vmatprep.mubr.f32.mxu0 0.0
        %1393 = vmatmul.mubr.f32.gmra.mrb[0].mxu0 %v1326
        %v1394 = vpop.f32.mrb[0].mxu0
        %v1395 = vadd.f32 0.0, %v1394
        %v1396 = vpop.f32.mrb[0].mxu0
        %1397 = vdwg.mxu0
        %v1399 = vsel %vm529, %v1323, 0
        %1401 = vmatprep.subr.mxu0 0.0
        %1402 = vmatpush1.msra.mxu0 %v1395
        %1403 = vmatprep.subr.mxu0 0.0
        %1404 = vmatpush1.msra.mxu0 0.0
        %1405 = vmatprep.subr.mxu0 0.0
        %1406 = vmatpush1.msra.mxu0 0.0
        %1407 = vmatprep.subr.mxu0 0.0
        %1408 = vmatpush1.msra.mxu0 0.0
        %1409 = vmatprep.subr.mxu0 0.0
        %1410 = vmatpush1.msra.mxu0 0.0
        %1411 = vmatprep.subr.mxu0 0.0
        %1412 = vmatpush1.msra.mxu0 0.0
        %1413 = vmatprep.subr.mxu0 0.0
        %1414 = vmatpush1.msra.mxu0 0.0
        %1415 = vmatprep.subr.mxu0 0.0
        %1416 = vmatpush1.msra.mxu0 0.0
        %1417 = vmatprep.subr.mxu0 0.0
        %1418 = vmatpush1.msra.mxu0 0.0
        %1419 = vmatprep.subr.mxu0 0.0
        %1420 = vmatpush1.msra.mxu0 0.0
        %1421 = vmatprep.subr.mxu0 0.0
        %1422 = vmatpush1.msra.mxu0 0.0
        %1423 = vmatprep.subr.mxu0 0.0
        %1424 = vmatpush1.msra.mxu0 0.0
        %1425 = vmatprep.subr.mxu0 0.0
        %1426 = vmatpush1.msra.mxu0 0.0
        %1427 = vmatprep.subr.mxu0 0.0
        %1428 = vmatpush1.msra.mxu0 0.0
        %1429 = vmatprep.subr.mxu0 0.0
        %1430 = vmatpush1.msra.mxu0 0.0
        %1431 = vmatprep.subr.mxu0 0.0
        %1432 = vmatpush1.msra.mxu0 0.0
        %1433 = vmatprep.subr.mxu0 0.0
        %1434 = vmatpush1.msra.mxu0 0.0
        %1435 = vmatprep.subr.mxu0 0.0
        %1436 = vmatpush1.msra.mxu0 0.0
        %1437 = vmatprep.subr.mxu0 0.0
        %1438 = vmatpush1.msra.mxu0 0.0
        %1439 = vmatprep.subr.mxu0 0.0
        %1440 = vmatpush1.msra.mxu0 0.0
        %1441 = vmatprep.subr.mxu0 0.0
        %1442 = vmatpush1.msra.mxu0 0.0
        %1443 = vmatprep.subr.mxu0 0.0
        %1444 = vmatpush1.msra.mxu0 0.0
        %1445 = vmatprep.subr.mxu0 0.0
        %1446 = vmatpush1.msra.mxu0 0.0
        %1447 = vmatprep.subr.mxu0 0.0
        %1448 = vmatpush1.msra.mxu0 0.0
        %1449 = vmatprep.subr.mxu0 0.0
        %1450 = vmatpush1.msra.mxu0 0.0
        %1451 = vmatprep.subr.mxu0 0.0
        %1452 = vmatpush1.msra.mxu0 0.0
        %1453 = vmatprep.subr.mxu0 0.0
        %1454 = vmatpush1.msra.mxu0 0.0
        %1455 = vmatprep.subr.mxu0 0.0
        %1456 = vmatpush1.msra.mxu0 0.0
        %1457 = vmatprep.subr.mxu0 0.0
        %1458 = vmatpush1.msra.mxu0 0.0
        %1459 = vmatprep.subr.mxu0 0.0
        %1460 = vmatpush1.msra.mxu0 0.0
        %1461 = vmatprep.subr.mxu0 0.0
        %1462 = vmatpush1.msra.mxu0 0.0
        %1463 = vmatprep.subr.mxu0 0.0
        %1464 = vmatpush1.msra.mxu0 0.0
        %1465 = vmatprep.mubr.f32.mxu0 0.0
        %1466 = vmatmul.mubr.f32.gmra.mrb[0].mxu0 %v1399
        %v1467 = vpop.f32.mrb[0].mxu0
        %v1468 = vadd.f32 0.0, %v1467
        %v1469 = vpop.f32.mrb[0].mxu0
        %1470 = vdwg.mxu0
        %v1471 = vadd.f32 %v1234, %v1468
        %v1472 = vld [vmem:[%s4] sm:$0x1]
        %v1474 = vlaneseq
        %v1475 = vshrl.u32 %v1474, 7
        %v1476 = vsub.s32 0, %v1475
        %v1477 = vrot.slane %v1472, %v1476
        %v1479 = vadd.f32 %v1471, %v1477
        %v1480 = vadd.f32 %v436, %v1479
        %v1481 = vsel %vm448, %v1480, 0.0
        %1482 = vadd.xlane.f32.xlu0 %v1481
        %v1483 = vpop.xlane.xlu0 %1482
        %v1484 = vrcp.pop 32.0
        %v1485 = vmul.f32 %v1483, %v1484
        %v1486 = vmul.f32 %v1480, %v1480
        %v1487 = vsel %vm448, %v1486, 0.0
        %1488 = vadd.xlane.f32.xlu0 %v1487
        %v1489 = vpop.xlane.xlu0 %1488
        %v1490 = vmul.f32 %v1489, %v1484
        %v1491 = vmul.f32 %v1485, %v1485
        %v1492 = vsub.f32 %v1490, %v1491
        %v1493 = vsub.f32 %v1480, %v1485
        %v1494 = vadd.f32 %v1492, 1e-05
        %v1495 = vrsqrt.pop %v1494
        %v1496 = vmul.f32 %v1493, %v1495
        %v1497 = vld [vmem:[%s5] sm:$0x1]
        %v1499 = vlaneseq
        %v1500 = vshrl.u32 %v1499, 7
        %v1501 = vsub.s32 0, %v1500
        %v1502 = vrot.slane %v1497, %v1501
        %v1504 = vmul.f32 %v1496, %v1502
        %v1505 = vld [vmem:[%s6] sm:$0x1]
        %v1507 = vlaneseq
        %v1508 = vshrl.u32 %v1507, 7
        %v1509 = vsub.s32 0, %v1508
        %v1510 = vrot.slane %v1505, %v1509
        %v1512 = vadd.f32 %v1504, %v1510
        %v1513 = vld [vmem:[%s7] sm:$0xff]
        %v1514 = vld [vmem:[%s7 + $0x8] sm:$0xff]
        %v1515 = vld [vmem:[%s7 + $0x10] sm:$0xff]
        %v1516 = vld [vmem:[%s7 + $0x18] sm:$0xff]
        %v1517 = vld [vmem:[%s8] sm:$0x1]
        %v1519 = vlaneseq
        %v1520 = vshrl.u32 %v1519, 7
        %v1521 = vsub.s32 0, %v1520
        %v1522 = vrot.slane %v1517, %v1521
        %v1525 = vsel %vm448, %v1512, 0
        %1527 = vmatprep.subr.mxu0 0.0
        %1528 = vmatpush1.msra.mxu0 %v1513
        %1529 = vmatprep.subr.mxu0 0.0
        %1530 = vmatpush1.msra.mxu0 %v1514
        %1531 = vmatprep.subr.mxu0 0.0
        %1532 = vmatpush1.msra.mxu0 %v1515
        %1533 = vmatprep.subr.mxu0 0.0
        %1534 = vmatpush1.msra.mxu0 %v1516
        %1535 = vmatprep.subr.mxu0 0.0
        %1536 = vmatpush1.msra.mxu0 0.0
        %1537 = vmatprep.subr.mxu0 0.0
        %1538 = vmatpush1.msra.mxu0 0.0
        %1539 = vmatprep.subr.mxu0 0.0
        %1540 = vmatpush1.msra.mxu0 0.0
        %1541 = vmatprep.subr.mxu0 0.0
        %1542 = vmatpush1.msra.mxu0 0.0
        %1543 = vmatprep.subr.mxu0 0.0
        %1544 = vmatpush1.msra.mxu0 0.0
        %1545 = vmatprep.subr.mxu0 0.0
        %1546 = vmatpush1.msra.mxu0 0.0
        %1547 = vmatprep.subr.mxu0 0.0
        %1548 = vmatpush1.msra.mxu0 0.0
        %1549 = vmatprep.subr.mxu0 0.0
        %1550 = vmatpush1.msra.mxu0 0.0
        %1551 = vmatprep.subr.mxu0 0.0
        %1552 = vmatpush1.msra.mxu0 0.0
        %1553 = vmatprep.subr.mxu0 0.0
        %1554 = vmatpush1.msra.mxu0 0.0
        %1555 = vmatprep.subr.mxu0 0.0
        %1556 = vmatpush1.msra.mxu0 0.0
        %1557 = vmatprep.subr.mxu0 0.0
        %1558 = vmatpush1.msra.mxu0 0.0
        %1559 = vmatprep.subr.mxu0 0.0
        %1560 = vmatpush1.msra.mxu0 0.0
        %1561 = vmatprep.subr.mxu0 0.0
        %1562 = vmatpush1.msra.mxu0 0.0
        %1563 = vmatprep.subr.mxu0 0.0
        %1564 = vmatpush1.msra.mxu0 0.0
        %1565 = vmatprep.subr.mxu0 0.0
        %1566 = vmatpush1.msra.mxu0 0.0
        %1567 = vmatprep.subr.mxu0 0.0
        %1568 = vmatpush1.msra.mxu0 0.0
        %1569 = vmatprep.subr.mxu0 0.0
        %1570 = vmatpush1.msra.mxu0 0.0
        %1571 = vmatprep.subr.mxu0 0.0
        %1572 = vmatpush1.msra.mxu0 0.0
        %1573 = vmatprep.subr.mxu0 0.0
        %1574 = vmatpush1.msra.mxu0 0.0
        %1575 = vmatprep.subr.mxu0 0.0
        %1576 = vmatpush1.msra.mxu0 0.0
        %1577 = vmatprep.subr.mxu0 0.0
        %1578 = vmatpush1.msra.mxu0 0.0
        %1579 = vmatprep.subr.mxu0 0.0
        %1580 = vmatpush1.msra.mxu0 0.0
        %1581 = vmatprep.subr.mxu0 0.0
        %1582 = vmatpush1.msra.mxu0 0.0
        %1583 = vmatprep.subr.mxu0 0.0
        %1584 = vmatpush1.msra.mxu0 0.0
        %1585 = vmatprep.subr.mxu0 0.0
        %1586 = vmatpush1.msra.mxu0 0.0
        %1587 = vmatprep.subr.mxu0 0.0
        %1588 = vmatpush1.msra.mxu0 0.0
        %1589 = vmatprep.subr.mxu0 0.0
        %1590 = vmatpush1.msra.mxu0 0.0
        %1591 = vmatprep.mubr.f32.mxu0 0.0
        %1592 = vmatmul.mubr.f32.gmra.mrb[0].mxu0 %v1525
        %v1593 = vpop.f32.mrb[0].mxu0
        %v1594 = vadd.f32 %v1522, %v1593
        %v1595 = vpop.f32.mrb[0].mxu0
        %1596 = vdwg.mxu0
        %v1597 = vmax.f32 %v1594, 0.0
        %v1598 = vld [vmem:[%s9] sm:$0xff]
        %v1599 = vld [vmem:[%s9 + $0x8] sm:$0xff]
        %v1600 = vld [vmem:[%s9 + $0x10] sm:$0xff]
        %v1601 = vld [vmem:[%s9 + $0x18] sm:$0xff]
        %v1602 = vld [vmem:[%s9 + $0x20] sm:$0xff]
        %v1603 = vld [vmem:[%s9 + $0x28] sm:$0xff]
        %v1604 = vld [vmem:[%s9 + $0x30] sm:$0xff]
        %v1605 = vld [vmem:[%s9 + $0x38] sm:$0xff]
        %v1606 = vld [vmem:[%s9 + $0x40] sm:$0xff]
        %v1607 = vld [vmem:[%s9 + $0x48] sm:$0xff]
        %v1608 = vld [vmem:[%s9 + $0x50] sm:$0xff]
        %v1609 = vld [vmem:[%s9 + $0x58] sm:$0xff]
        %v1610 = vld [vmem:[%s9 + $0x60] sm:$0xff]
        %v1611 = vld [vmem:[%s9 + $0x68] sm:$0xff]
        %v1612 = vld [vmem:[%s9 + $0x70] sm:$0xff]
        %v1613 = vld [vmem:[%s9 + $0x78] sm:$0xff]
        %v1614 = vld [vmem:[%s10] sm:$0x1]
        %v1616 = vlaneseq
        %v1617 = vshrl.u32 %v1616, 7
        %v1618 = vsub.s32 0, %v1617
        %v1619 = vrot.slane %v1614, %v1618
        %1621 = vmatprep.subr.mxu0 0.0
        %1622 = vmatpush1.msra.mxu0 %v1598
        %1623 = vmatprep.subr.mxu0 0.0
        %1624 = vmatpush1.msra.mxu0 %v1599
        %1625 = vmatprep.subr.mxu0 0.0
        %1626 = vmatpush1.msra.mxu0 %v1600
        %1627 = vmatprep.subr.mxu0 0.0
        %1628 = vmatpush1.msra.mxu0 %v1601
        %1629 = vmatprep.subr.mxu0 0.0
        %1630 = vmatpush1.msra.mxu0 %v1602
        %1631 = vmatprep.subr.mxu0 0.0
        %1632 = vmatpush1.msra.mxu0 %v1603
        %1633 = vmatprep.subr.mxu0 0.0
        %1634 = vmatpush1.msra.mxu0 %v1604
        %1635 = vmatprep.subr.mxu0 0.0
        %1636 = vmatpush1.msra.mxu0 %v1605
        %1637 = vmatprep.subr.mxu0 0.0
        %1638 = vmatpush1.msra.mxu0 %v1606
        %1639 = vmatprep.subr.mxu0 0.0
        %1640 = vmatpush1.msra.mxu0 %v1607
        %1641 = vmatprep.subr.mxu0 0.0
        %1642 = vmatpush1.msra.mxu0 %v1608
        %1643 = vmatprep.subr.mxu0 0.0
        %1644 = vmatpush1.msra.mxu0 %v1609
        %1645 = vmatprep.subr.mxu0 0.0
        %1646 = vmatpush1.msra.mxu0 %v1610
        %1647 = vmatprep.subr.mxu0 0.0
        %1648 = vmatpush1.msra.mxu0 %v1611
        %1649 = vmatprep.subr.mxu0 0.0
        %1650 = vmatpush1.msra.mxu0 %v1612
        %1651 = vmatprep.subr.mxu0 0.0
        %1652 = vmatpush1.msra.mxu0 %v1613
        %1653 = vmatprep.subr.mxu0 0.0
        %1654 = vmatpush1.msra.mxu0 0.0
        %1655 = vmatprep.subr.mxu0 0.0
        %1656 = vmatpush1.msra.mxu0 0.0
        %1657 = vmatprep.subr.mxu0 0.0
        %1658 = vmatpush1.msra.mxu0 0.0
        %1659 = vmatprep.subr.mxu0 0.0
        %1660 = vmatpush1.msra.mxu0 0.0
        %1661 = vmatprep.subr.mxu0 0.0
        %1662 = vmatpush1.msra.mxu0 0.0
        %1663 = vmatprep.subr.mxu0 0.0
        %1664 = vmatpush1.msra.mxu0 0.0
        %1665 = vmatprep.subr.mxu0 0.0
        %1666 = vmatpush1.msra.mxu0 0.0
        %1667 = vmatprep.subr.mxu0 0.0
        %1668 = vmatpush1.msra.mxu0 0.0
        %1669 = vmatprep.subr.mxu0 0.0
        %1670 = vmatpush1.msra.mxu0 0.0
        %1671 = vmatprep.subr.mxu0 0.0
        %1672 = vmatpush1.msra.mxu0 0.0
        %1673 = vmatprep.subr.mxu0 0.0
        %1674 = vmatpush1.msra.mxu0 0.0
        %1675 = vmatprep.subr.mxu0 0.0
        %1676 = vmatpush1.msra.mxu0 0.0
        %1677 = vmatprep.subr.mxu0 0.0
        %1678 = vmatpush1.msra.mxu0 0.0
        %1679 = vmatprep.subr.mxu0 0.0
        %1680 = vmatpush1.msra.mxu0 0.0
        %1681 = vmatprep.subr.mxu0 0.0
        %1682 = vmatpush1.msra.mxu0 0.0
        %1683 = vmatprep.subr.mxu0 0.0
        %1684 = vmatpush1.msra.mxu0 0.0
        %1685 = vmatprep.mubr.f32.mxu0 0.0
        %1686 = vmatmul.mubr.f32.gmra.mrb[0].mxu0 %v1597
        %v1687 = vpop.f32.mrb[0].mxu0
        %v1688 = vadd.f32 %v1619, %v1687
        %v1689 = vpop.f32.mrb[0].mxu0
        %1690 = vdwg.mxu0
        %v1691 = vadd.f32 %v1512, %v1688
        %v1692 = vsel %vm448, %v1691, 0.0
        %1693 = vadd.xlane.f32.xlu0 %v1692
        %v1694 = vpop.xlane.xlu0 %1693
        %v1695 = vmul.f32 %v1694, %v1484
        %v1696 = vmul.f32 %v1691, %v1691
        %v1697 = vsel %vm448, %v1696, 0.0
        %1698 = vadd.xlane.f32.xlu0 %v1697
        %v1699 = vpop.xlane.xlu0 %1698
        %v1700 = vmul.f32 %v1699, %v1484
        %v1701 = vmul.f32 %v1695, %v1695
        %v1702 = vsub.f32 %v1700, %v1701
        %v1703 = vsub.f32 %v1691, %v1695
        %v1704 = vadd.f32 %v1702, 1e-05
        %v1705 = vrsqrt.pop %v1704
        %v1706 = vmul.f32 %v1703, %v1705
        %v1707 = vld [vmem:[%s11] sm:$0x1]
        %v1709 = vlaneseq
        %v1710 = vshrl.u32 %v1709, 7
        %v1711 = vsub.s32 0, %v1710
        %v1712 = vrot.slane %v1707, %v1711
        %v1714 = vmul.f32 %v1706, %v1712
        %v1715 = vld [vmem:[%s12] sm:$0x1]
        %v1717 = vlaneseq
        %v1718 = vshrl.u32 %v1717, 7
        %v1719 = vsub.s32 0, %v1718
        %v1720 = vrot.slane %v1715, %v1719
        %v1722 = vadd.f32 %v1714, %v1720
        %1723 = vst.msk [vmem:[%s431] sm:$0xff] %vm448, %v1722
        %s1724 = sand.u32 %s313, 1
        %s1725 = scalar_lea.sflag [#allocation3], %s1724
        %s1726 = sand.u32 %s313, 1
        %s1727 = smul.addr %s1726, 8
        %s1728 = scalar_lea.vmem [#allocation2], %s1727
        // Predicated region
        $region73: #{tpu_custom_call.1} parent=71 // pred_check
          %p1729 = pneg %p323
        $region74: #{tpu_custom_call.1} parent=71 // pred_check_branch
          %1731 = sbr.rel (%p1729) target = $region76
        $region75: #{tpu_custom_call.1} parent=71 // pred_region
          %s1733 = ssub.s32 128, 128
          %1734 = vsyncadd %s1725, %s1733
          %s1735 = smul.addr %s27, 128
          %s1736 = scalar_lea.hbm %s13, %s1735
          %s1738 = sshll.u32 %s1728, 4
          %s1739 = int_to_ptr.vmem [resolvable:$true] %s1738
          %1741 = dma.vmem_to_hbm [thread:$0]  %s1739, 128, %s1736, %s1725
        $region76: #{tpu_custom_call.1} parent=71 // pred_fallthru
          _
      $region72: #{tpu_custom_call.1} parent=5 // pred_fallthru
        _
      %p1742 = scmp.le.s32.totalorder 2, %s22
      // Predicated region
      $region77: #{tpu_custom_call.1} parent=5 // pred_check
        %p1743 = pneg %p1742
      $region78: #{tpu_custom_call.1} parent=5 // pred_check_branch
        %1745 = sbr.rel (%p1743) target = $region80
      $region79: #{tpu_custom_call.1} parent=5 // pred_region
        %s1746 = ssub.s32 %s22, 2
        // Predicated region
        $region81: #{tpu_custom_call.1} parent=79 // pred_check
          %p1747 = pneg %p329
        $region82: #{tpu_custom_call.1} parent=79 // pred_check_branch
          %1749 = sbr.rel (%p1747) target = $region84
        $region83: #{tpu_custom_call.1} parent=79 // pred_region
          %s1750 = sand.u32 %s314, 1
          %s1751 = scalar_lea.sflag [#allocation3], %s1750
          %s1752 = sand.u32 %s314, 1
          %s1753 = smul.addr %s1752, 8
          %s1754 = scalar_lea.vmem [#allocation2], %s1753
          %1755 = dma.done %s1751, 128
        $region84: #{tpu_custom_call.1} parent=79 // pred_fallthru
          _
      $region80: #{tpu_custom_call.1} parent=5 // pred_fallthru
        _
    $region6: #{tpu_custom_call.1} parent=1 // loop_footer
      %s26 = sadd.s32 1, %s22
    $region7: #{tpu_custom_call.1} parent=1 // loop_footer_branch
      %21 = sbr.rel target = $region3
    $region8: #{tpu_custom_call.1} parent=1 // loop_exit
      _
    %1756 = vsyncpa [#allocation3], 1
    %s1757 = scalar_lea.sflag [#allocation3], 1
    %1758 = vsyncpa %s1757, 1

</llo_original>
